<compile_context>
chip_gen: v5e
topology: v5e:2x2
jax: 0.10.0
libtpu: 0.0.40
codegen_flags: <defaults>
</compile_context>

<pallas_src>
import math

import jax
import jax.numpy as jnp
from jax import lax
from jax.experimental import pallas as pl
from jax.experimental.pallas import tpu as pltpu

# ----- small synthetic BERT config (same structure as bert-base, tiny dims) -----
VOCAB = 50          # tokenizer vocab after resize_token_embeddings (synthetic)
HIDDEN = 32         # hidden_size
N_LAYERS = 2        # num_hidden_layers
N_HEADS = 2         # num_attention_heads
HEAD_DIM = HIDDEN // N_HEADS
INTERMEDIATE = 64   # intermediate_size
MAX_POS = 16        # max_position_embeddings
TYPE_VOCAB = 2      # token_type vocab
N_CLASSES = 3       # output_classes
CLS_PAD = 128       # lane-dense padded classifier width (sliced back to N_CLASSES)
LN_EPS = 1e-12      # BERT layer_norm_eps


# ---------------------------- fused encoder kernel ----------------------------
def _layernorm(h, gamma, beta):
    mu = jnp.mean(h, axis=-1, keepdims=True)
    var = jnp.mean(jnp.square(h - mu), axis=-1, keepdims=True)
    return (h - mu) * lax.rsqrt(var + LN_EPS) * gamma + beta


def _encoder_kernel(emb_ref, mask_ref, eg_ref, eb_ref,
                    wqkv_ref, bqkv_ref, wo_ref, bo_ref, g1_ref, b1_ref,
                    wi_ref, bi_ref, wo2_ref, bo2_ref, g2_ref, b2_ref,
                    pw_ref, pb_ref, cw_ref, cb_ref,
                    out_ref, x_acc):
    """One grid step = (batch element, encoder layer)."""
    li = pl.program_id(1)

    # Layer 0: residual-free embedding LayerNorm seeds the VMEM-resident activations.
    @pl.when(li == 0)
    def _():
        x_acc[...] = _layernorm(emb_ref[...], eg_ref[...], eb_ref[...])

    x = x_acc[...]                      # (S, HIDDEN), stays in VMEM across layers
    mask = mask_ref[...]                # (1, S) additive key mask

    # Fused Q/K/V projection: one lane-dense (S, 3*HIDDEN) matmul.
    qkv = jnp.dot(x, wqkv_ref[...], preferred_element_type=jnp.float32) + bqkv_ref[...]

    scale = 1.0 / math.sqrt(HEAD_DIM)
    attn = None
    for h in range(N_HEADS):            # unrolled, per-head attention in-layout
        lo = h * HEAD_DIM
        q = qkv[:, lo:lo + HEAD_DIM]
        k = qkv[:, HIDDEN + lo:HIDDEN + lo + HEAD_DIM]
        v = qkv[:, 2 * HIDDEN + lo:2 * HIDDEN + lo + HEAD_DIM]
        # q k^T: contract last dims directly (no explicit transpose of K).
        scores = lax.dot_general(q, k, (((1,), (1,)), ((), ())),
                                 preferred_element_type=jnp.float32)
        scores = scores * scale + mask
        scores = scores - jnp.max(scores, axis=-1, keepdims=True)
        p = jnp.exp(scores)
        p = p * pl.reciprocal(jnp.sum(p, axis=-1, keepdims=True), approx=True)
        ctx_h = jnp.dot(p, v, preferred_element_type=jnp.float32)
        # Fold the per-head output projection (row-slice of wo) into the loop:
        # sum_h ctx_h @ wo[h*Dh:(h+1)*Dh, :] == concat(ctx_h) @ wo.
        part = jnp.dot(ctx_h, wo_ref[lo:lo + HEAD_DIM, :],
                       preferred_element_type=jnp.float32)
        attn = part if attn is None else attn + part
    attn = attn + bo_ref[...]

    x = _layernorm(attn + x, g1_ref[...], b1_ref[...])

    inter = jnp.dot(x, wi_ref[...], preferred_element_type=jnp.float32) + bi_ref[...]
    # tanh-approximate GELU (EUP tanh slot); ~1e-3 deviation vs BERT's exact erf GELU.
    inter = 0.5 * inter * (1.0 + jnp.tanh(
        0.7978845608028654 * (inter + 0.044715 * inter * inter * inter)))
    ff = jnp.dot(inter, wo2_ref[...], preferred_element_type=jnp.float32) + bo2_ref[...]
    x = _layernorm(ff + x, g2_ref[...], b2_ref[...])
    x_acc[...] = x

    # Last layer: pooler (tanh dense on [CLS]) + classifier head, fused in the tail.
    @pl.when(li == pl.num_programs(1) - 1)
    def _():
        cls_tok = x[0:1, :]
        pooled = jnp.tanh(jnp.dot(cls_tok, pw_ref[...],
                                  preferred_element_type=jnp.float32) + pb_ref[...])
        # TODO(synk): hidden_dropout_prob dropout on pooled output is identity in eval mode.
        out_ref[...] = jnp.dot(pooled, cw_ref[...],
                               preferred_element_type=jnp.float32) + cb_ref[...]


# ---------------------------- parameters ----------------------------
def init_params(key):
    def nrm(k, shape):
        return 0.02 * jax.random.normal(k, shape, dtype=jnp.float32)

    keys = jax.random.split(key, 6)
    p = {
        "word_emb": nrm(keys[0], (VOCAB, HIDDEN)),
        "pos_emb": nrm(keys[1], (MAX_POS, HIDDEN)),
        "type_emb": nrm(keys[2], (TYPE_VOCAB, HIDDEN)),
        "emb_ln_g": jnp.ones((1, HIDDEN), jnp.float32),
        "emb_ln_b": jnp.zeros((1, HIDDEN), jnp.float32),
    }
    lk = jax.random.split(keys[3], 4)
    # Per-layer weights stacked along a leading [N_LAYERS] axis (streamed by grid).
    p["wqkv"] = nrm(lk[0], (N_LAYERS, HIDDEN, 3 * HIDDEN))   # fused Wq|Wk|Wv
    p["bqkv"] = jnp.zeros((N_LAYERS, 1, 3 * HIDDEN), jnp.float32)
    p["wo"] = nrm(lk[1], (N_LAYERS, HIDDEN, HIDDEN))
    p["bo"] = jnp.zeros((N_LAYERS, 1, HIDDEN), jnp.float32)
    p["attn_ln_g"] = jnp.ones((N_LAYERS, 1, HIDDEN), jnp.float32)
    p["attn_ln_b"] = jnp.zeros((N_LAYERS, 1, HIDDEN), jnp.float32)
    p["wi"] = nrm(lk[2], (N_LAYERS, HIDDEN, INTERMEDIATE))
    p["bi"] = jnp.zeros((N_LAYERS, 1, INTERMEDIATE), jnp.float32)
    p["wo2"] = nrm(lk[3], (N_LAYERS, INTERMEDIATE, HIDDEN))
    p["bo2"] = jnp.zeros((N_LAYERS, 1, HIDDEN), jnp.float32)
    p["out_ln_g"] = jnp.ones((N_LAYERS, 1, HIDDEN), jnp.float32)
    p["out_ln_b"] = jnp.zeros((N_LAYERS, 1, HIDDEN), jnp.float32)
    p["pool_w"] = nrm(keys[4], (HIDDEN, HIDDEN))
    p["pool_b"] = jnp.zeros((1, HIDDEN), jnp.float32)
    cls_w = nrm(keys[5], (HIDDEN, N_CLASSES))
    p["cls_w_pad"] = jnp.zeros((HIDDEN, CLS_PAD), jnp.float32).at[:, :N_CLASSES].set(cls_w)
    p["cls_b_pad"] = jnp.zeros((1, CLS_PAD), jnp.float32)
    return p


# ---------------------------- forward pass ----------------------------
def pretrained_bert_forward(params, input_ids, token_type_ids, attention_mask):
    b, s = input_ids.shape

    # Embedding gathers stay in XLA (glue); everything downstream is one fused kernel.
    emb = (jnp.take(params["word_emb"], input_ids, axis=0)
           + params["pos_emb"][None, :s, :]
           + jnp.take(params["type_emb"], token_type_ids, axis=0))        # (B, S, H)
    mask_add = ((1.0 - attention_mask.astype(jnp.float32)) * -10000.0).reshape(b, 1, s)

    def batch_spec(shape):   # per-batch block, leading batch dim squeezed
        return pl.BlockSpec((None,) + shape, lambda bi, li: (bi,) + (0,) * len(shape))

    def layer_spec(shape):   # per-layer block, leading layer dim squeezed
        return pl.BlockSpec((None,) + shape, lambda bi, li: (li,) + (0,) * len(shape))

    def shared_spec(shape):  # full array, same for every grid step
        return pl.BlockSpec(shape, lambda bi, li: (0,) * len(shape))

    logits_pad = pl.pallas_call(
        _encoder_kernel,
        grid=(b, N_LAYERS),
        in_specs=[
            batch_spec((s, HIDDEN)),             # emb
            batch_spec((1, s)),                  # additive attention mask
            shared_spec((1, HIDDEN)),            # emb_ln_g
            shared_spec((1, HIDDEN)),            # emb_ln_b
            layer_spec((HIDDEN, 3 * HIDDEN)),    # wqkv
            layer_spec((1, 3 * HIDDEN)),         # bqkv
            layer_spec((HIDDEN, HIDDEN)),        # wo
            layer_spec((1, HIDDEN)),             # bo
            layer_spec((1, HIDDEN)),             # attn_ln_g
            layer_spec((1, HIDDEN)),             # attn_ln_b
            layer_spec((HIDDEN, INTERMEDIATE)),  # wi
            layer_spec((1, INTERMEDIATE)),       # bi
            layer_spec((INTERMEDIATE, HIDDEN)),  # wo2
            layer_spec((1, HIDDEN)),             # bo2
            layer_spec((1, HIDDEN)),             # out_ln_g
            layer_spec((1, HIDDEN)),             # out_ln_b
            shared_spec((HIDDEN, HIDDEN)),       # pool_w
            shared_spec((1, HIDDEN)),            # pool_b
            shared_spec((HIDDEN, CLS_PAD)),      # cls_w (lane-padded)
            shared_spec((1, CLS_PAD)),           # cls_b (lane-padded)
        ],
        out_specs=pl.BlockSpec((None, 1, CLS_PAD), lambda bi, li: (bi, 0, 0)),
        out_shape=jax.ShapeDtypeStruct((b, 1, CLS_PAD), jnp.float32),
        scratch_shapes=[pltpu.VMEM((s, HIDDEN), jnp.float32)],   # resident activations
        compiler_params=pltpu.CompilerParams(
            dimension_semantics=("parallel", "arbitrary")),
    )(emb, mask_add,
      params["emb_ln_g"], params["emb_ln_b"],
      params["wqkv"], params["bqkv"], params["wo"], params["bo"],
      params["attn_ln_g"], params["attn_ln_b"],
      params["wi"], params["bi"], params["wo2"], params["bo2"],
      params["out_ln_g"], params["out_ln_b"],
      params["pool_w"], params["pool_b"], params["cls_w_pad"], params["cls_b_pad"])

    return logits_pad[:, 0, :N_CLASSES]


if __name__ == "__main__":
    key = jax.random.PRNGKey(0)
    pkey, ikey = jax.random.split(key, 2)
    params = init_params(pkey)

    B, S = 2, 8
    input_ids = jax.random.randint(ikey, (B, S), 0, VOCAB, dtype=jnp.int32)
    token_type_ids = jnp.concatenate(
        [jnp.zeros((B, S // 2), jnp.int32), jnp.ones((B, S // 2), jnp.int32)], axis=1)
    attention_mask = jnp.ones((B, S), jnp.int32).at[1, S - 2:].set(0)

    logits = jax.jit(pretrained_bert_forward)(
        params, input_ids, token_type_ids, attention_mask)
    jax.block_until_ready(logits)
    assert logits.shape == (B, N_CLASSES) and logits.dtype == jnp.float32
    print("KERNEL_OK")
</pallas_src>

<mosaic_0001>
module attributes {stable_mosaic.version = 11 : i64} {
  func.func @_encoder_kernel(%arg0: i32, %arg1: i32, %arg2: memref<1x8x32xf32, #tpu.memory_space<vmem>>, %arg3: memref<1x1x8xf32, #tpu.memory_space<vmem>>, %arg4: memref<1x32xf32, #tpu.memory_space<vmem>>, %arg5: memref<1x32xf32, #tpu.memory_space<vmem>>, %arg6: memref<1x32x96xf32, #tpu.memory_space<vmem>>, %arg7: memref<1x1x96xf32, #tpu.memory_space<vmem>>, %arg8: memref<1x32x32xf32, #tpu.memory_space<vmem>>, %arg9: memref<1x1x32xf32, #tpu.memory_space<vmem>>, %arg10: memref<1x1x32xf32, #tpu.memory_space<vmem>>, %arg11: memref<1x1x32xf32, #tpu.memory_space<vmem>>, %arg12: memref<1x32x64xf32, #tpu.memory_space<vmem>>, %arg13: memref<1x1x64xf32, #tpu.memory_space<vmem>>, %arg14: memref<1x64x32xf32, #tpu.memory_space<vmem>>, %arg15: memref<1x1x32xf32, #tpu.memory_space<vmem>>, %arg16: memref<1x1x32xf32, #tpu.memory_space<vmem>>, %arg17: memref<1x1x32xf32, #tpu.memory_space<vmem>>, %arg18: memref<32x32xf32, #tpu.memory_space<vmem>>, %arg19: memref<1x32xf32, #tpu.memory_space<vmem>>, %arg20: memref<32x128xf32, #tpu.memory_space<vmem>>, %arg21: memref<1x128xf32, #tpu.memory_space<vmem>>, %arg22: memref<1x1x128xf32, #tpu.memory_space<vmem>>, %arg23: memref<8x32xf32, #tpu.memory_space<vmem>>) attributes {dimension_semantics = [#tpu.dimension_semantics<parallel>, #tpu.dimension_semantics<arbitrary>], iteration_bounds = array<i64: 2, 2>, scalar_prefetch = 0 : i64, scratch_operands = 1 : i64, tpu.core_type = #tpu.core_type<tc>, window_params = [{transform_indices = @transform_0, window_bounds = array<i64: 1, 8, 32>}, {transform_indices = @transform_1, window_bounds = array<i64: 1, 1, 8>}, {pipeline_mode = #tpu.pipeline_mode<synchronous>, transform_indices = @transform_2, window_bounds = array<i64: 1, 32>}, {pipeline_mode = #tpu.pipeline_mode<synchronous>, transform_indices = @transform_3, window_bounds = array<i64: 1, 32>}, {transform_indices = @transform_4, window_bounds = array<i64: 1, 32, 96>}, {transform_indices = @transform_5, window_bounds = array<i64: 1, 1, 96>}, {transform_indices = @transform_6, window_bounds = array<i64: 1, 32, 32>}, {transform_indices = @transform_7, window_bounds = array<i64: 1, 1, 32>}, {transform_indices = @transform_8, window_bounds = array<i64: 1, 1, 32>}, {transform_indices = @transform_9, window_bounds = array<i64: 1, 1, 32>}, {transform_indices = @transform_10, window_bounds = array<i64: 1, 32, 64>}, {transform_indices = @transform_11, window_bounds = array<i64: 1, 1, 64>}, {transform_indices = @transform_12, window_bounds = array<i64: 1, 64, 32>}, {transform_indices = @transform_13, window_bounds = array<i64: 1, 1, 32>}, {transform_indices = @transform_14, window_bounds = array<i64: 1, 1, 32>}, {transform_indices = @transform_15, window_bounds = array<i64: 1, 1, 32>}, {pipeline_mode = #tpu.pipeline_mode<synchronous>, transform_indices = @transform_16, window_bounds = array<i64: 32, 32>}, {pipeline_mode = #tpu.pipeline_mode<synchronous>, transform_indices = @transform_17, window_bounds = array<i64: 1, 32>}, {pipeline_mode = #tpu.pipeline_mode<synchronous>, transform_indices = @transform_18, window_bounds = array<i64: 32, 128>}, {pipeline_mode = #tpu.pipeline_mode<synchronous>, transform_indices = @transform_19, window_bounds = array<i64: 1, 128>}, {transform_indices = @transform_20, window_bounds = array<i64: 1, 1, 128>}]} {
    %c0_i32 = arith.constant 0 : i32
    %0 = arith.cmpi eq, %arg1, %c0_i32 : i32
    %1 = arith.extui %0 : i1 to i32
    %c0_i32_0 = arith.constant 0 : i32
    %2 = arith.cmpi ne, %1, %c0_i32_0 : i32
    scf.if %2 {
      %c0_74 = arith.constant 0 : index
      %c0_75 = arith.constant 0 : index
      %c0_76 = arith.constant 0 : index
      %147 = vector.load %arg2[%c0_74, %c0_75, %c0_76] : memref<1x8x32xf32, #tpu.memory_space<vmem>>, vector<1x8x32xf32>
      %148 = vector.shape_cast %147 : vector<1x8x32xf32> to vector<8x32xf32>
      %c0_77 = arith.constant 0 : index
      %c0_78 = arith.constant 0 : index
      %149 = vector.load %arg4[%c0_77, %c0_78] : memref<1x32xf32, #tpu.memory_space<vmem>>, vector<1x32xf32>
      %c0_79 = arith.constant 0 : index
      %c0_80 = arith.constant 0 : index
      %150 = vector.load %arg5[%c0_79, %c0_80] : memref<1x32xf32, #tpu.memory_space<vmem>>, vector<1x32xf32>
      %cst_81 = arith.constant dense<0.000000e+00> : vector<8xf32>
      %151 = vector.multi_reduction <add>, %148, %cst_81 [1] : vector<8x32xf32> to vector<8xf32>
      %152 = vector.shape_cast %151 : vector<8xf32> to vector<8x1xf32>
      %cst_82 = arith.constant 3.200000e+01 : f32
      %153 = vector.broadcast %cst_82 : f32 to vector<8x1xf32>
      %154 = arith.divf %152, %153 : vector<8x1xf32>
      %155 = vector.broadcast %154 : vector<8x1xf32> to vector<8x32xf32>
      %156 = arith.subf %148, %155 : vector<8x32xf32>
      %157 = arith.mulf %156, %156 : vector<8x32xf32>
      %cst_83 = arith.constant dense<0.000000e+00> : vector<8xf32>
      %158 = vector.multi_reduction <add>, %157, %cst_83 [1] : vector<8x32xf32> to vector<8xf32>
      %159 = vector.shape_cast %158 : vector<8xf32> to vector<8x1xf32>
      %cst_84 = arith.constant 3.200000e+01 : f32
      %160 = vector.broadcast %cst_84 : f32 to vector<8x1xf32>
      %161 = arith.divf %159, %160 : vector<8x1xf32>
      %162 = vector.broadcast %154 : vector<8x1xf32> to vector<8x32xf32>
      %163 = arith.subf %148, %162 : vector<8x32xf32>
      %cst_85 = arith.constant 9.99999996E-13 : f32
      %164 = vector.broadcast %cst_85 : f32 to vector<8x1xf32>
      %165 = arith.addf %161, %164 : vector<8x1xf32>
      %166 = math.rsqrt %165 : vector<8x1xf32>
      %167 = vector.broadcast %166 : vector<8x1xf32> to vector<8x32xf32>
      %168 = arith.mulf %163, %167 : vector<8x32xf32>
      %169 = vector.broadcast %149 : vector<1x32xf32> to vector<8x32xf32>
      %170 = arith.mulf %168, %169 : vector<8x32xf32>
      %171 = vector.broadcast %150 : vector<1x32xf32> to vector<8x32xf32>
      %172 = arith.addf %170, %171 : vector<8x32xf32>
      %c0_86 = arith.constant 0 : index
      %c0_87 = arith.constant 0 : index
      %173 = vector.load %arg23[%c0_86, %c0_87] : memref<8x32xf32, #tpu.memory_space<vmem>>, vector<8x32xf32>
      tpu.vector_store %arg23[%c0_86, %c0_87], %172 {strides = array<i32>} : memref<8x32xf32, #tpu.memory_space<vmem>>, vector<8x32xf32>,
    } else {
    }
    %c0 = arith.constant 0 : index
    %c0_1 = arith.constant 0 : index
    %3 = vector.load %arg23[%c0, %c0_1] : memref<8x32xf32, #tpu.memory_space<vmem>>, vector<8x32xf32>
    %c0_2 = arith.constant 0 : index
    %c0_3 = arith.constant 0 : index
    %c0_4 = arith.constant 0 : index
    %4 = vector.load %arg3[%c0_2, %c0_3, %c0_4] : memref<1x1x8xf32, #tpu.memory_space<vmem>>, vector<1x1x8xf32>
    %5 = vector.shape_cast %4 : vector<1x1x8xf32> to vector<1x8xf32>
    %c0_5 = arith.constant 0 : index
    %c0_6 = arith.constant 0 : index
    %c0_7 = arith.constant 0 : index
    %6 = vector.load %arg6[%c0_5, %c0_6, %c0_7] : memref<1x32x96xf32, #tpu.memory_space<vmem>>, vector<1x32x96xf32>
    %7 = vector.shape_cast %6 : vector<1x32x96xf32> to vector<32x96xf32>
    %cst = arith.constant dense<0.000000e+00> : vector<8x96xf32>
    %8 = tpu.matmul %3, %7, %cst {dimension_numbers = #tpu.dot_dimension_numbers<[1], [0], [0], [1], [0, 0, 1, 1], [], []>} : vector<8x32xf32>, vector<32x96xf32>, vector<8x96xf32> -> vector<8x96xf32>
    %c0_8 = arith.constant 0 : index
    %c0_9 = arith.constant 0 : index
    %c0_10 = arith.constant 0 : index
    %9 = vector.load %arg7[%c0_8, %c0_9, %c0_10] : memref<1x1x96xf32, #tpu.memory_space<vmem>>, vector<1x1x96xf32>
    %10 = vector.shape_cast %9 : vector<1x1x96xf32> to vector<1x96xf32>
    %11 = vector.broadcast %10 : vector<1x96xf32> to vector<8x96xf32>
    %12 = arith.addf %8, %11 : vector<8x96xf32>
    %13 = vector.extract_strided_slice %12 {offsets = [0, 0], sizes = [8, 16], strides = [1, 1]} : vector<8x96xf32> to vector<8x16xf32>
    %14 = vector.extract_strided_slice %12 {offsets = [0, 32], sizes = [8, 16], strides = [1, 1]} : vector<8x96xf32> to vector<8x16xf32>
    %15 = vector.extract_strided_slice %12 {offsets = [0, 64], sizes = [8, 16], strides = [1, 1]} : vector<8x96xf32> to vector<8x16xf32>
    %cst_11 = arith.constant dense<0.000000e+00> : vector<8x8xf32>
    %16 = tpu.matmul %13, %14, %cst_11 {dimension_numbers = #tpu.dot_dimension_numbers<[1], [1], [0], [0], [0, 0, 1, 0], [], []>} : vector<8x16xf32>, vector<8x16xf32>, vector<8x8xf32> -> vector<8x8xf32>
    %cst_12 = arith.constant 2.500000e-01 : f32
    %17 = vector.broadcast %cst_12 : f32 to vector<8x8xf32>
    %18 = arith.mulf %16, %17 : vector<8x8xf32>
    %19 = vector.broadcast %5 : vector<1x8xf32> to vector<8x8xf32>
    %20 = arith.addf %18, %19 : vector<8x8xf32>
    %cst_13 = arith.constant dense<0xFF800000> : vector<8xf32>
    %21 = vector.multi_reduction <maximumf>, %20, %cst_13 [1] : vector<8x8xf32> to vector<8xf32>
    %22 = vector.shape_cast %21 : vector<8xf32> to vector<8x1xf32>
    %23 = vector.broadcast %22 : vector<8x1xf32> to vector<8x8xf32>
    %24 = arith.subf %20, %23 : vector<8x8xf32>
    %25 = math.exp %24 : vector<8x8xf32>
    %cst_14 = arith.constant dense<0.000000e+00> : vector<8xf32>
    %26 = vector.multi_reduction <add>, %25, %cst_14 [1] : vector<8x8xf32> to vector<8xf32>
    %27 = vector.shape_cast %26 : vector<8xf32> to vector<8x1xf32>
    %28 = tpu.reciprocal %27 {approx = true} : vector<8x1xf32> -> vector<8x1xf32>
    %29 = vector.broadcast %28 : vector<8x1xf32> to vector<8x8xf32>
    %30 = arith.mulf %25, %29 : vector<8x8xf32>
    %cst_15 = arith.constant dense<0.000000e+00> : vector<8x16xf32>
    %31 = tpu.matmul %30, %15, %cst_15 {dimension_numbers = #tpu.dot_dimension_numbers<[1], [0], [0], [1], [0, 0, 1, 1], [], []>} : vector<8x8xf32>, vector<8x16xf32>, vector<8x16xf32> -> vector<8x16xf32>
    %c0_16 = arith.constant 0 : index
    %c0_17 = arith.constant 0 : index
    %c0_18 = arith.constant 0 : index
    %32 = vector.load %arg8[%c0_16, %c0_17, %c0_18] : memref<1x32x32xf32, #tpu.memory_space<vmem>>, vector<1x16x32xf32>
    %33 = vector.shape_cast %32 : vector<1x16x32xf32> to vector<16x32xf32>
    %cst_19 = arith.constant dense<0.000000e+00> : vector<8x32xf32>
    %34 = tpu.matmul %31, %33, %cst_19 {dimension_numbers = #tpu.dot_dimension_numbers<[1], [0], [0], [1], [0, 0, 1, 1], [], []>} : vector<8x16xf32>, vector<16x32xf32>, vector<8x32xf32> -> vector<8x32xf32>
    %35 = vector.extract_strided_slice %12 {offsets = [0, 16], sizes = [8, 16], strides = [1, 1]} : vector<8x96xf32> to vector<8x16xf32>
    %36 = vector.extract_strided_slice %12 {offsets = [0, 48], sizes = [8, 16], strides = [1, 1]} : vector<8x96xf32> to vector<8x16xf32>
    %37 = vector.extract_strided_slice %12 {offsets = [0, 80], sizes = [8, 16], strides = [1, 1]} : vector<8x96xf32> to vector<8x16xf32>
    %cst_20 = arith.constant dense<0.000000e+00> : vector<8x8xf32>
    %38 = tpu.matmul %35, %36, %cst_20 {dimension_numbers = #tpu.dot_dimension_numbers<[1], [1], [0], [0], [0, 0, 1, 0], [], []>} : vector<8x16xf32>, vector<8x16xf32>, vector<8x8xf32> -> vector<8x8xf32>
    %cst_21 = arith.constant 2.500000e-01 : f32
    %39 = vector.broadcast %cst_21 : f32 to vector<8x8xf32>
    %40 = arith.mulf %38, %39 : vector<8x8xf32>
    %41 = vector.broadcast %5 : vector<1x8xf32> to vector<8x8xf32>
    %42 = arith.addf %40, %41 : vector<8x8xf32>
    %cst_22 = arith.constant dense<0xFF800000> : vector<8xf32>
    %43 = vector.multi_reduction <maximumf>, %42, %cst_22 [1] : vector<8x8xf32> to vector<8xf32>
    %44 = vector.shape_cast %43 : vector<8xf32> to vector<8x1xf32>
    %45 = vector.broadcast %44 : vector<8x1xf32> to vector<8x8xf32>
    %46 = arith.subf %42, %45 : vector<8x8xf32>
    %47 = math.exp %46 : vector<8x8xf32>
    %cst_23 = arith.constant dense<0.000000e+00> : vector<8xf32>
    %48 = vector.multi_reduction <add>, %47, %cst_23 [1] : vector<8x8xf32> to vector<8xf32>
    %49 = vector.shape_cast %48 : vector<8xf32> to vector<8x1xf32>
    %50 = tpu.reciprocal %49 {approx = true} : vector<8x1xf32> -> vector<8x1xf32>
    %51 = vector.broadcast %50 : vector<8x1xf32> to vector<8x8xf32>
    %52 = arith.mulf %47, %51 : vector<8x8xf32>
    %cst_24 = arith.constant dense<0.000000e+00> : vector<8x16xf32>
    %53 = tpu.matmul %52, %37, %cst_24 {dimension_numbers = #tpu.dot_dimension_numbers<[1], [0], [0], [1], [0, 0, 1, 1], [], []>} : vector<8x8xf32>, vector<8x16xf32>, vector<8x16xf32> -> vector<8x16xf32>
    %c0_25 = arith.constant 0 : index
    %c16 = arith.constant 16 : index
    %c0_26 = arith.constant 0 : index
    %54 = vector.load %arg8[%c0_25, %c16, %c0_26] : memref<1x32x32xf32, #tpu.memory_space<vmem>>, vector<1x16x32xf32>
    %55 = vector.shape_cast %54 : vector<1x16x32xf32> to vector<16x32xf32>
    %cst_27 = arith.constant dense<0.000000e+00> : vector<8x32xf32>
    %56 = tpu.matmul %53, %55, %cst_27 {dimension_numbers = #tpu.dot_dimension_numbers<[1], [0], [0], [1], [0, 0, 1, 1], [], []>} : vector<8x16xf32>, vector<16x32xf32>, vector<8x32xf32> -> vector<8x32xf32>
    %57 = arith.addf %34, %56 : vector<8x32xf32>
    %c0_28 = arith.constant 0 : index
    %c0_29 = arith.constant 0 : index
    %c0_30 = arith.constant 0 : index
    %58 = vector.load %arg9[%c0_28, %c0_29, %c0_30] : memref<1x1x32xf32, #tpu.memory_space<vmem>>, vector<1x1x32xf32>
    %59 = vector.shape_cast %58 : vector<1x1x32xf32> to vector<1x32xf32>
    %60 = vector.broadcast %59 : vector<1x32xf32> to vector<8x32xf32>
    %61 = arith.addf %57, %60 : vector<8x32xf32>
    %62 = arith.addf %61, %3 : vector<8x32xf32>
    %c0_31 = arith.constant 0 : index
    %c0_32 = arith.constant 0 : index
    %c0_33 = arith.constant 0 : index
    %63 = vector.load %arg10[%c0_31, %c0_32, %c0_33] : memref<1x1x32xf32, #tpu.memory_space<vmem>>, vector<1x1x32xf32>
    %64 = vector.shape_cast %63 : vector<1x1x32xf32> to vector<1x32xf32>
    %c0_34 = arith.constant 0 : index
    %c0_35 = arith.constant 0 : index
    %c0_36 = arith.constant 0 : index
    %65 = vector.load %arg11[%c0_34, %c0_35, %c0_36] : memref<1x1x32xf32, #tpu.memory_space<vmem>>, vector<1x1x32xf32>
    %66 = vector.shape_cast %65 : vector<1x1x32xf32> to vector<1x32xf32>
    %cst_37 = arith.constant dense<0.000000e+00> : vector<8xf32>
    %67 = vector.multi_reduction <add>, %62, %cst_37 [1] : vector<8x32xf32> to vector<8xf32>
    %68 = vector.shape_cast %67 : vector<8xf32> to vector<8x1xf32>
    %cst_38 = arith.constant 3.200000e+01 : f32
    %69 = vector.broadcast %cst_38 : f32 to vector<8x1xf32>
    %70 = arith.divf %68, %69 : vector<8x1xf32>
    %71 = vector.broadcast %70 : vector<8x1xf32> to vector<8x32xf32>
    %72 = arith.subf %62, %71 : vector<8x32xf32>
    %73 = arith.mulf %72, %72 : vector<8x32xf32>
    %cst_39 = arith.constant dense<0.000000e+00> : vector<8xf32>
    %74 = vector.multi_reduction <add>, %73, %cst_39 [1] : vector<8x32xf32> to vector<8xf32>
    %75 = vector.shape_cast %74 : vector<8xf32> to vector<8x1xf32>
    %cst_40 = arith.constant 3.200000e+01 : f32
    %76 = vector.broadcast %cst_40 : f32 to vector<8x1xf32>
    %77 = arith.divf %75, %76 : vector<8x1xf32>
    %78 = vector.broadcast %70 : vector<8x1xf32> to vector<8x32xf32>
    %79 = arith.subf %62, %78 : vector<8x32xf32>
    %cst_41 = arith.constant 9.99999996E-13 : f32
    %80 = vector.broadcast %cst_41 : f32 to vector<8x1xf32>
    %81 = arith.addf %77, %80 : vector<8x1xf32>
    %82 = math.rsqrt %81 : vector<8x1xf32>
    %83 = vector.broadcast %82 : vector<8x1xf32> to vector<8x32xf32>
    %84 = arith.mulf %79, %83 : vector<8x32xf32>
    %85 = vector.broadcast %64 : vector<1x32xf32> to vector<8x32xf32>
    %86 = arith.mulf %84, %85 : vector<8x32xf32>
    %87 = vector.broadcast %66 : vector<1x32xf32> to vector<8x32xf32>
    %88 = arith.addf %86, %87 : vector<8x32xf32>
    %c0_42 = arith.constant 0 : index
    %c0_43 = arith.constant 0 : index
    %c0_44 = arith.constant 0 : index
    %89 = vector.load %arg12[%c0_42, %c0_43, %c0_44] : memref<1x32x64xf32, #tpu.memory_space<vmem>>, vector<1x32x64xf32>
    %90 = vector.shape_cast %89 : vector<1x32x64xf32> to vector<32x64xf32>
    %cst_45 = arith.constant dense<0.000000e+00> : vector<8x64xf32>
    %91 = tpu.matmul %88, %90, %cst_45 {dimension_numbers = #tpu.dot_dimension_numbers<[1], [0], [0], [1], [0, 0, 1, 1], [], []>} : vector<8x32xf32>, vector<32x64xf32>, vector<8x64xf32> -> vector<8x64xf32>
    %c0_46 = arith.constant 0 : index
    %c0_47 = arith.constant 0 : index
    %c0_48 = arith.constant 0 : index
    %92 = vector.load %arg13[%c0_46, %c0_47, %c0_48] : memref<1x1x64xf32, #tpu.memory_space<vmem>>, vector<1x1x64xf32>
    %93 = vector.shape_cast %92 : vector<1x1x64xf32> to vector<1x64xf32>
    %94 = vector.broadcast %93 : vector<1x64xf32> to vector<8x64xf32>
    %95 = arith.addf %91, %94 : vector<8x64xf32>
    %cst_49 = arith.constant 5.000000e-01 : f32
    %96 = vector.broadcast %cst_49 : f32 to vector<8x64xf32>
    %97 = arith.mulf %96, %95 : vector<8x64xf32>
    %cst_50 = arith.constant 4.471500e-02 : f32
    %98 = vector.broadcast %cst_50 : f32 to vector<8x64xf32>
    %99 = arith.mulf %98, %95 : vector<8x64xf32>
    %100 = arith.mulf %99, %95 : vector<8x64xf32>
    %101 = arith.mulf %100, %95 : vector<8x64xf32>
    %102 = arith.addf %95, %101 : vector<8x64xf32>
    %cst_51 = arith.constant 0.797884583 : f32
    %103 = vector.broadcast %cst_51 : f32 to vector<8x64xf32>
    %104 = arith.mulf %103, %102 : vector<8x64xf32>
    %105 = math.tanh %104 : vector<8x64xf32>
    %cst_52 = arith.constant 1.000000e+00 : f32
    %106 = vector.broadcast %cst_52 : f32 to vector<8x64xf32>
    %107 = arith.addf %106, %105 : vector<8x64xf32>
    %108 = arith.mulf %97, %107 : vector<8x64xf32>
    %c0_53 = arith.constant 0 : index
    %c0_54 = arith.constant 0 : index
    %c0_55 = arith.constant 0 : index
    %109 = vector.load %arg14[%c0_53, %c0_54, %c0_55] : memref<1x64x32xf32, #tpu.memory_space<vmem>>, vector<1x64x32xf32>
    %110 = vector.shape_cast %109 : vector<1x64x32xf32> to vector<64x32xf32>
    %cst_56 = arith.constant dense<0.000000e+00> : vector<8x32xf32>
    %111 = tpu.matmul %108, %110, %cst_56 {dimension_numbers = #tpu.dot_dimension_numbers<[1], [0], [0], [1], [0, 0, 1, 1], [], []>} : vector<8x64xf32>, vector<64x32xf32>, vector<8x32xf32> -> vector<8x32xf32>
    %c0_57 = arith.constant 0 : index
    %c0_58 = arith.constant 0 : index
    %c0_59 = arith.constant 0 : index
    %112 = vector.load %arg15[%c0_57, %c0_58, %c0_59] : memref<1x1x32xf32, #tpu.memory_space<vmem>>, vector<1x1x32xf32>
    %113 = vector.shape_cast %112 : vector<1x1x32xf32> to vector<1x32xf32>
    %114 = vector.broadcast %113 : vector<1x32xf32> to vector<8x32xf32>
    %115 = arith.addf %111, %114 : vector<8x32xf32>
    %116 = arith.addf %115, %88 : vector<8x32xf32>
    %c0_60 = arith.constant 0 : index
    %c0_61 = arith.constant 0 : index
    %c0_62 = arith.constant 0 : index
    %117 = vector.load %arg16[%c0_60, %c0_61, %c0_62] : memref<1x1x32xf32, #tpu.memory_space<vmem>>, vector<1x1x32xf32>
    %118 = vector.shape_cast %117 : vector<1x1x32xf32> to vector<1x32xf32>
    %c0_63 = arith.constant 0 : index
    %c0_64 = arith.constant 0 : index
    %c0_65 = arith.constant 0 : index
    %119 = vector.load %arg17[%c0_63, %c0_64, %c0_65] : memref<1x1x32xf32, #tpu.memory_space<vmem>>, vector<1x1x32xf32>
    %120 = vector.shape_cast %119 : vector<1x1x32xf32> to vector<1x32xf32>
    %cst_66 = arith.constant dense<0.000000e+00> : vector<8xf32>
    %121 = vector.multi_reduction <add>, %116, %cst_66 [1] : vector<8x32xf32> to vector<8xf32>
    %122 = vector.shape_cast %121 : vector<8xf32> to vector<8x1xf32>
    %cst_67 = arith.constant 3.200000e+01 : f32
    %123 = vector.broadcast %cst_67 : f32 to vector<8x1xf32>
    %124 = arith.divf %122, %123 : vector<8x1xf32>
    %125 = vector.broadcast %124 : vector<8x1xf32> to vector<8x32xf32>
    %126 = arith.subf %116, %125 : vector<8x32xf32>
    %127 = arith.mulf %126, %126 : vector<8x32xf32>
    %cst_68 = arith.constant dense<0.000000e+00> : vector<8xf32>
    %128 = vector.multi_reduction <add>, %127, %cst_68 [1] : vector<8x32xf32> to vector<8xf32>
    %129 = vector.shape_cast %128 : vector<8xf32> to vector<8x1xf32>
    %cst_69 = arith.constant 3.200000e+01 : f32
    %130 = vector.broadcast %cst_69 : f32 to vector<8x1xf32>
    %131 = arith.divf %129, %130 : vector<8x1xf32>
    %132 = vector.broadcast %124 : vector<8x1xf32> to vector<8x32xf32>
    %133 = arith.subf %116, %132 : vector<8x32xf32>
    %cst_70 = arith.constant 9.99999996E-13 : f32
    %134 = vector.broadcast %cst_70 : f32 to vector<8x1xf32>
    %135 = arith.addf %131, %134 : vector<8x1xf32>
    %136 = math.rsqrt %135 : vector<8x1xf32>
    %137 = vector.broadcast %136 : vector<8x1xf32> to vector<8x32xf32>
    %138 = arith.mulf %133, %137 : vector<8x32xf32>
    %139 = vector.broadcast %118 : vector<1x32xf32> to vector<8x32xf32>
    %140 = arith.mulf %138, %139 : vector<8x32xf32>
    %141 = vector.broadcast %120 : vector<1x32xf32> to vector<8x32xf32>
    %142 = arith.addf %140, %141 : vector<8x32xf32>
    %c0_71 = arith.constant 0 : index
    %c0_72 = arith.constant 0 : index
    %143 = vector.load %arg23[%c0_71, %c0_72] : memref<8x32xf32, #tpu.memory_space<vmem>>, vector<8x32xf32>
    tpu.vector_store %arg23[%c0_71, %c0_72], %142 {strides = array<i32>} : memref<8x32xf32, #tpu.memory_space<vmem>>, vector<8x32xf32>,
    %c1_i32 = arith.constant 1 : i32
    %144 = arith.cmpi eq, %arg1, %c1_i32 : i32
    %145 = arith.extui %144 : i1 to i32
    %c0_i32_73 = arith.constant 0 : i32
    %146 = arith.cmpi ne, %145, %c0_i32_73 : i32
    scf.if %146 {
      %147 = vector.extract_strided_slice %142 {offsets = [0, 0], sizes = [1, 32], strides = [1, 1]} : vector<8x32xf32> to vector<1x32xf32>
      %c0_74 = arith.constant 0 : index
      %c0_75 = arith.constant 0 : index
      %148 = vector.load %arg18[%c0_74, %c0_75] : memref<32x32xf32, #tpu.memory_space<vmem>>, vector<32x32xf32>
      %cst_76 = arith.constant dense<0.000000e+00> : vector<1x32xf32>
      %149 = tpu.matmul %147, %148, %cst_76 {dimension_numbers = #tpu.dot_dimension_numbers<[1], [0], [0], [1], [0, 0, 1, 1], [], []>} : vector<1x32xf32>, vector<32x32xf32>, vector<1x32xf32> -> vector<1x32xf32>
      %c0_77 = arith.constant 0 : index
      %c0_78 = arith.constant 0 : index
      %150 = vector.load %arg19[%c0_77, %c0_78] : memref<1x32xf32, #tpu.memory_space<vmem>>, vector<1x32xf32>
      %151 = arith.addf %149, %150 : vector<1x32xf32>
      %152 = math.tanh %151 : vector<1x32xf32>
      %c0_79 = arith.constant 0 : index
      %c0_80 = arith.constant 0 : index
      %153 = vector.load %arg20[%c0_79, %c0_80] : memref<32x128xf32, #tpu.memory_space<vmem>>, vector<32x128xf32>
      %cst_81 = arith.constant dense<0.000000e+00> : vector<1x128xf32>
      %154 = tpu.matmul %152, %153, %cst_81 {dimension_numbers = #tpu.dot_dimension_numbers<[1], [0], [0], [1], [0, 0, 1, 1], [], []>} : vector<1x32xf32>, vector<32x128xf32>, vector<1x128xf32> -> vector<1x128xf32>
      %c0_82 = arith.constant 0 : index
      %c0_83 = arith.constant 0 : index
      %155 = vector.load %arg21[%c0_82, %c0_83] : memref<1x128xf32, #tpu.memory_space<vmem>>, vector<1x128xf32>
      %156 = arith.addf %154, %155 : vector<1x128xf32>
      %c0_84 = arith.constant 0 : index
      %c0_85 = arith.constant 0 : index
      %c0_86 = arith.constant 0 : index
      %157 = vector.load %arg22[%c0_84, %c0_85, %c0_86] : memref<1x1x128xf32, #tpu.memory_space<vmem>>, vector<1x1x128xf32>
      %158 = vector.shape_cast %157 : vector<1x1x128xf32> to vector<1x128xf32>
      %159 = vector.shape_cast %156 : vector<1x128xf32> to vector<1x1x128xf32>
      tpu.vector_store %arg22[%c0_84, %c0_85, %c0_86], %159 {strides = array<i32>} : memref<1x1x128xf32, #tpu.memory_space<vmem>>, vector<1x1x128xf32>,
    } else {
    }
    return
  }
  func.func @transform_0(%arg0: i32, %arg1: i32) -> (i32, i32, i32) {
    %c0_i32 = arith.constant 0 : i32
    %c0_i32_0 = arith.constant 0 : i32
    %c0_i32_1 = arith.constant 0 : i32
    return %arg0, %c0_i32, %c0_i32_0 : i32, i32, i32
  }
  func.func @transform_1(%arg0: i32, %arg1: i32) -> (i32, i32, i32) {
    %c0_i32 = arith.constant 0 : i32
    %c0_i32_0 = arith.constant 0 : i32
    %c0_i32_1 = arith.constant 0 : i32
    return %arg0, %c0_i32, %c0_i32_0 : i32, i32, i32
  }
  func.func @transform_2(%arg0: i32, %arg1: i32) -> (i32, i32) {
    %c0_i32 = arith.constant 0 : i32
    %c0_i32_0 = arith.constant 0 : i32
    %c0_i32_1 = arith.constant 0 : i32
    return %c0_i32, %c0_i32_0 : i32, i32
  }
  func.func @transform_3(%arg0: i32, %arg1: i32) -> (i32, i32) {
    %c0_i32 = arith.constant 0 : i32
    %c0_i32_0 = arith.constant 0 : i32
    %c0_i32_1 = arith.constant 0 : i32
    return %c0_i32, %c0_i32_0 : i32, i32
  }
  func.func @transform_4(%arg0: i32, %arg1: i32) -> (i32, i32, i32) {
    %c0_i32 = arith.constant 0 : i32
    %c0_i32_0 = arith.constant 0 : i32
    %c0_i32_1 = arith.constant 0 : i32
    return %arg1, %c0_i32, %c0_i32_0 : i32, i32, i32
  }
  func.func @transform_5(%arg0: i32, %arg1: i32) -> (i32, i32, i32) {
    %c0_i32 = arith.constant 0 : i32
    %c0_i32_0 = arith.constant 0 : i32
    %c0_i32_1 = arith.constant 0 : i32
    return %arg1, %c0_i32, %c0_i32_0 : i32, i32, i32
  }
  func.func @transform_6(%arg0: i32, %arg1: i32) -> (i32, i32, i32) {
    %c0_i32 = arith.constant 0 : i32
    %c0_i32_0 = arith.constant 0 : i32
    %c0_i32_1 = arith.constant 0 : i32
    return %arg1, %c0_i32, %c0_i32_0 : i32, i32, i32
  }
  func.func @transform_7(%arg0: i32, %arg1: i32) -> (i32, i32, i32) {
    %c0_i32 = arith.constant 0 : i32
    %c0_i32_0 = arith.constant 0 : i32
    %c0_i32_1 = arith.constant 0 : i32
    return %arg1, %c0_i32, %c0_i32_0 : i32, i32, i32
  }
  func.func @transform_8(%arg0: i32, %arg1: i32) -> (i32, i32, i32) {
    %c0_i32 = arith.constant 0 : i32
    %c0_i32_0 = arith.constant 0 : i32
    %c0_i32_1 = arith.constant 0 : i32
    return %arg1, %c0_i32, %c0_i32_0 : i32, i32, i32
  }
  func.func @transform_9(%arg0: i32, %arg1: i32) -> (i32, i32, i32) {
    %c0_i32 = arith.constant 0 : i32
    %c0_i32_0 = arith.constant 0 : i32
    %c0_i32_1 = arith.constant 0 : i32
    return %arg1, %c0_i32, %c0_i32_0 : i32, i32, i32
  }
  func.func @transform_10(%arg0: i32, %arg1: i32) -> (i32, i32, i32) {
    %c0_i32 = arith.constant 0 : i32
    %c0_i32_0 = arith.constant 0 : i32
    %c0_i32_1 = arith.constant 0 : i32
    return %arg1, %c0_i32, %c0_i32_0 : i32, i32, i32
  }
  func.func @transform_11(%arg0: i32, %arg1: i32) -> (i32, i32, i32) {
    %c0_i32 = arith.constant 0 : i32
    %c0_i32_0 = arith.constant 0 : i32
    %c0_i32_1 = arith.constant 0 : i32
    return %arg1, %c0_i32, %c0_i32_0 : i32, i32, i32
  }
  func.func @transform_12(%arg0: i32, %arg1: i32) -> (i32, i32, i32) {
    %c0_i32 = arith.constant 0 : i32
    %c0_i32_0 = arith.constant 0 : i32
    %c0_i32_1 = arith.constant 0 : i32
    return %arg1, %c0_i32, %c0_i32_0 : i32, i32, i32
  }
  func.func @transform_13(%arg0: i32, %arg1: i32) -> (i32, i32, i32) {
    %c0_i32 = arith.constant 0 : i32
    %c0_i32_0 = arith.constant 0 : i32
    %c0_i32_1 = arith.constant 0 : i32
    return %arg1, %c0_i32, %c0_i32_0 : i32, i32, i32
  }
  func.func @transform_14(%arg0: i32, %arg1: i32) -> (i32, i32, i32) {
    %c0_i32 = arith.constant 0 : i32
    %c0_i32_0 = arith.constant 0 : i32
    %c0_i32_1 = arith.constant 0 : i32
    return %arg1, %c0_i32, %c0_i32_0 : i32, i32, i32
  }
  func.func @transform_15(%arg0: i32, %arg1: i32) -> (i32, i32, i32) {
    %c0_i32 = arith.constant 0 : i32
    %c0_i32_0 = arith.constant 0 : i32
    %c0_i32_1 = arith.constant 0 : i32
    return %arg1, %c0_i32, %c0_i32_0 : i32, i32, i32
  }
  func.func @transform_16(%arg0: i32, %arg1: i32) -> (i32, i32) {
    %c0_i32 = arith.constant 0 : i32
    %c0_i32_0 = arith.constant 0 : i32
    %c0_i32_1 = arith.constant 0 : i32
    return %c0_i32, %c0_i32_0 : i32, i32
  }
  func.func @transform_17(%arg0: i32, %arg1: i32) -> (i32, i32) {
    %c0_i32 = arith.constant 0 : i32
    %c0_i32_0 = arith.constant 0 : i32
    %c0_i32_1 = arith.constant 0 : i32
    return %c0_i32, %c0_i32_0 : i32, i32
  }
  func.func @transform_18(%arg0: i32, %arg1: i32) -> (i32, i32) {
    %c0_i32 = arith.constant 0 : i32
    %c0_i32_0 = arith.constant 0 : i32
    %c0_i32_1 = arith.constant 0 : i32
    return %c0_i32, %c0_i32_0 : i32, i32
  }
  func.func @transform_19(%arg0: i32, %arg1: i32) -> (i32, i32) {
    %c0_i32 = arith.constant 0 : i32
    %c0_i32_0 = arith.constant 0 : i32
    %c0_i32_1 = arith.constant 0 : i32
    return %c0_i32, %c0_i32_0 : i32, i32
  }
  func.func @transform_20(%arg0: i32, %arg1: i32) -> (i32, i32, i32) {
    %c0_i32 = arith.constant 0 : i32
    %c0_i32_0 = arith.constant 0 : i32
    %c0_i32_1 = arith.constant 0 : i32
    return %arg0, %c0_i32, %c0_i32_0 : i32, i32, i32
  }
}

</mosaic_0001>

<llo_original>
// kernel: pretrained_bert_forward.1
$region0: #{pretrained_bert_forward.1}
  #allocation0 [shape = 'u32[]', space=smem, size = 0x4, offset = 0x4, fixed_abs, tag = 'smem constant byte address 0x4 - core index']
  #allocation1 [shape = 'u32[72,128]{1,0:T(1,128)}', space=vmem, size = 0x9000, scoped, tag = 'internal scratch']
  #allocation2 [shape = 'f32[8,32]{1,0:T(8,128)}', space=vmem, size = 0x1000, scoped, tag = 'scratch operand']
  %s0 = inlined_call_operand.vmem [shape: f32[2,8,32], index: 0, kind: input, shape index: {}]
  %s1 = inlined_call_operand.vmem [shape: f32[2,1,8], index: 1, kind: input, shape index: {}]
  %s2 = inlined_call_operand.vmem [shape: f32[1,32], index: 2, kind: input, shape index: {}]
  %s3 = inlined_call_operand.vmem [shape: f32[1,32], index: 3, kind: input, shape index: {}]
  %s4 = inlined_call_operand.vmem [shape: f32[2,32,96], index: 4, kind: input, shape index: {}]
  %s5 = inlined_call_operand.vmem [shape: f32[2,1,96], index: 5, kind: input, shape index: {}]
  %s6 = inlined_call_operand.vmem [shape: f32[2,32,32], index: 6, kind: input, shape index: {}]
  %s7 = inlined_call_operand.vmem [shape: f32[2,1,32], index: 7, kind: input, shape index: {}]
  %s8 = inlined_call_operand.vmem [shape: f32[2,1,32], index: 8, kind: input, shape index: {}]
  %s9 = inlined_call_operand.vmem [shape: f32[2,1,32], index: 9, kind: input, shape index: {}]
  %s10 = inlined_call_operand.vmem [shape: f32[2,32,64], index: 10, kind: input, shape index: {}]
  %s11 = inlined_call_operand.vmem [shape: f32[2,1,64], index: 11, kind: input, shape index: {}]
  %s12 = inlined_call_operand.vmem [shape: f32[2,64,32], index: 12, kind: input, shape index: {}]
  %s13 = inlined_call_operand.vmem [shape: f32[2,1,32], index: 13, kind: input, shape index: {}]
  %s14 = inlined_call_operand.vmem [shape: f32[2,1,32], index: 14, kind: input, shape index: {}]
  %s15 = inlined_call_operand.vmem [shape: f32[2,1,32], index: 15, kind: input, shape index: {}]
  %s16 = inlined_call_operand.vmem [shape: f32[32,32], index: 16, kind: input, shape index: {}]
  %s17 = inlined_call_operand.vmem [shape: f32[1,32], index: 17, kind: input, shape index: {}]
  %s18 = inlined_call_operand.vmem [shape: f32[32,128], index: 18, kind: input, shape index: {}]
  %s19 = inlined_call_operand.vmem [shape: f32[1,128], index: 19, kind: input, shape index: {}]
  %s20 = inlined_call_operand.hbm [shape: f32[2,1,128], index: 20, kind: output, shape index: {}]
  %s21 = sld [smem:[#allocation0]]
  $region121: #{pretrained_bert_forward.1} parent=0
    _
  %s23 = ssub.s32 1, %s21
  %s24 = scalar_select 0, %s23, %s21
  $region1: #{pretrained_bert_forward.1} parent=0
    #allocation3 [shape = 'u8[1024]{0}', space=vmem, size = 0x400, scoped, tag = 'output window, operand 0']
    #allocation4 [shape = 's32[2]{0}', space=sflag, size = 0x8, scoped, tag = 'scoped memory for pretrained_bert_forward.1']
    %25 = vsyncpa [#allocation4], 0
    %s26 = scalar_lea.sflag [#allocation4], 1
    %27 = vsyncpa %s26, 0
    loop: start=0, step=1, limit=6
    $region2: #{pretrained_bert_forward.1} parent=1 // loop_pre_header
      _
    $region3: #{pretrained_bert_forward.1} parent=1 // loop_header
      %s29 = sphi 0, %s33
      %p30 = scmp.ge.s32.totalorder %s29, 6
      %s36 = sphi 0, %s48
      %s37 = sphi 0, %s44
      %s38 = sphi 0, %s36
      %s39 = sphi 0, %s37
      %s40 = sphi 0, %s38
      %s41 = sphi 0, %s39
      %s51 = sphi 0, %s53
      %s54 = sphi 0, %s51
      %s55 = sphi 0, %s54
      %s71 = sphi 0, %s55
      %s77 = sphi 0, %s79
      %s80 = sphi 0, %s77
      %s81 = sphi 0, %s80
      %s97 = sphi 0, %s81
      %s101 = sphi 0, %s101
      %s103 = sphi 0, %s101
      %s104 = sphi 0, %s103
      %s118 = sphi 0, %s104
      %s122 = sphi 0, %s122
      %s124 = sphi 0, %s122
      %s125 = sphi 0, %s124
      %s139 = sphi 0, %s125
      %s145 = sphi 0, %s147
      %s148 = sphi 0, %s145
      %s149 = sphi 0, %s148
      %s165 = sphi 0, %s149
      %s171 = sphi 0, %s173
      %s174 = sphi 0, %s171
      %s175 = sphi 0, %s174
      %s191 = sphi 0, %s175
      %s197 = sphi 0, %s199
      %s200 = sphi 0, %s197
      %s201 = sphi 0, %s200
      %s217 = sphi 0, %s201
      %s223 = sphi 0, %s225
      %s226 = sphi 0, %s223
      %s227 = sphi 0, %s226
      %s243 = sphi 0, %s227
      %s249 = sphi 0, %s251
      %s252 = sphi 0, %s249
      %s253 = sphi 0, %s252
      %s269 = sphi 0, %s253
      %s275 = sphi 0, %s277
      %s278 = sphi 0, %s275
      %s279 = sphi 0, %s278
      %s295 = sphi 0, %s279
      %s301 = sphi 0, %s303
      %s304 = sphi 0, %s301
      %s305 = sphi 0, %s304
      %s321 = sphi 0, %s305
      %s327 = sphi 0, %s329
      %s330 = sphi 0, %s327
      %s331 = sphi 0, %s330
      %s347 = sphi 0, %s331
      %s353 = sphi 0, %s355
      %s356 = sphi 0, %s353
      %s357 = sphi 0, %s356
      %s373 = sphi 0, %s357
      %s379 = sphi 0, %s381
      %s382 = sphi 0, %s379
      %s383 = sphi 0, %s382
      %s399 = sphi 0, %s383
      %s405 = sphi 0, %s407
      %s408 = sphi 0, %s405
      %s409 = sphi 0, %s408
      %s425 = sphi 0, %s409
      %s431 = sphi 0, %s433
      %s434 = sphi 0, %s431
      %s435 = sphi 0, %s434
      %s451 = sphi 0, %s435
      %s455 = sphi 0, %s455
      %s457 = sphi 0, %s455
      %s458 = sphi 0, %s457
      %s472 = sphi 0, %s458
      %s476 = sphi 0, %s476
      %s478 = sphi 0, %s476
      %s479 = sphi 0, %s478
      %s493 = sphi 0, %s479
      %s497 = sphi 0, %s497
      %s499 = sphi 0, %s497
      %s500 = sphi 0, %s499
      %s514 = sphi 0, %s500
      %s518 = sphi 0, %s518
      %s520 = sphi 0, %s518
      %s521 = sphi 0, %s520
      %s535 = sphi 0, %s521
      %s541 = sphi 0, %s543
      %s544 = sphi 0, %s541
      %s545 = sphi 0, %s544
      %s561 = sphi 0, %s545
    $region4: #{pretrained_bert_forward.1} parent=1 // loop_header_branch
      %32 = sbr.rel (%p30) target = $region8
    $region5: #{pretrained_bert_forward.1} parent=1 // loop_body
      %s34 = ssub.s32 %s29, 1
      %s35 = ssub.s32 %s29, 2
      %s42 = sadd.s32 1, %s37
      %p43 = scmp.ge.s32.totalorder %s42, 2
      %s44 = scalar_select %p43, 0, %s42
      %s45 = sadd.s32 1, %s36
      %s46 = scalar_select %p43, %s45, %s36
      %p47 = scmp.ge.s32.totalorder %s46, 2
      %s48 = scalar_select %p47, 0, %s46
      %s49 = ssub.s32 %s36, %s48
      %p50 = scmp.eq.s32.totalorder %s49, 0
      %s52 = sadd.s32 %s51, 1
      %s53 = scalar_select %p50, %s51, %s52
      %p56 = pneg %p50
      %p57 = scmp.eq.s32.totalorder %s29, 3
      %p58 = por %p56, %p57
      %p59 = scmp.ne.s32.totalorder %s51, %s54
      %p60 = scmp.eq.s32.totalorder %s29, 0
      %p61 = por %p59, %p60
      %p62 = scmp.ne.s32.totalorder %s51, %s54
      %p63 = scmp.eq.s32.totalorder %s34, 3
      %p64 = por %p62, %p63
      %p65 = scmp.ne.s32.totalorder %s54, %s55
      %p66 = scmp.eq.s32.totalorder %s34, 0
      %p67 = por %p65, %p66
      %p68 = scmp.ne.s32.totalorder %s54, %s55
      %p69 = scmp.eq.s32.totalorder %s35, 3
      %p70 = por %p68, %p69
      %p72 = scmp.ne.s32.totalorder %s55, %s71
      %p73 = scmp.eq.s32.totalorder %s35, 0
      %p74 = por %p72, %p73
      %s75 = ssub.s32 %s36, %s48
      %p76 = scmp.eq.s32.totalorder %s75, 0
      %s78 = sadd.s32 %s77, 1
      %s79 = scalar_select %p76, %s77, %s78
      %p82 = pneg %p76
      %p83 = scmp.eq.s32.totalorder %s29, 3
      %p84 = por %p82, %p83
      %p85 = scmp.ne.s32.totalorder %s77, %s80
      %p86 = scmp.eq.s32.totalorder %s29, 0
      %p87 = por %p85, %p86
      %p88 = scmp.ne.s32.totalorder %s77, %s80
      %p89 = scmp.eq.s32.totalorder %s34, 3
      %p90 = por %p88, %p89
      %p91 = scmp.ne.s32.totalorder %s80, %s81
      %p92 = scmp.eq.s32.totalorder %s34, 0
      %p93 = por %p91, %p92
      %p94 = scmp.ne.s32.totalorder %s80, %s81
      %p95 = scmp.eq.s32.totalorder %s35, 3
      %p96 = por %p94, %p95
      %p98 = scmp.ne.s32.totalorder %s81, %s97
      %p99 = scmp.eq.s32.totalorder %s35, 0
      %p100 = por %p98, %p99
      %s102 = sadd.s32 %s101, 1
      %p105 = scmp.eq.s32.totalorder %s29, 3
      %p106 = scmp.ne.s32.totalorder %s101, %s103
      %p107 = scmp.eq.s32.totalorder %s29, 0
      %p108 = por %p106, %p107
      %p109 = scmp.ne.s32.totalorder %s101, %s103
      %p110 = scmp.eq.s32.totalorder %s34, 3
      %p111 = por %p109, %p110
      %p112 = scmp.ne.s32.totalorder %s103, %s104
      %p113 = scmp.eq.s32.totalorder %s34, 0
      %p114 = por %p112, %p113
      %p115 = scmp.ne.s32.totalorder %s103, %s104
      %p116 = scmp.eq.s32.totalorder %s35, 3
      %p117 = por %p115, %p116
      %p119 = scmp.ne.s32.totalorder %s104, %s118
      %p120 = scmp.eq.s32.totalorder %s35, 0
      %p121 = por %p119, %p120
      %s123 = sadd.s32 %s122, 1
      %p126 = scmp.eq.s32.totalorder %s29, 3
      %p127 = scmp.ne.s32.totalorder %s122, %s124
      %p128 = scmp.eq.s32.totalorder %s29, 0
      %p129 = por %p127, %p128
      %p130 = scmp.ne.s32.totalorder %s122, %s124
      %p131 = scmp.eq.s32.totalorder %s34, 3
      %p132 = por %p130, %p131
      %p133 = scmp.ne.s32.totalorder %s124, %s125
      %p134 = scmp.eq.s32.totalorder %s34, 0
      %p135 = por %p133, %p134
      %p136 = scmp.ne.s32.totalorder %s124, %s125
      %p137 = scmp.eq.s32.totalorder %s35, 3
      %p138 = por %p136, %p137
      %p140 = scmp.ne.s32.totalorder %s125, %s139
      %p141 = scmp.eq.s32.totalorder %s35, 0
      %p142 = por %p140, %p141
      %s143 = ssub.s32 %s37, %s44
      %p144 = scmp.eq.s32.totalorder %s143, 0
      %s146 = sadd.s32 %s145, 1
      %s147 = scalar_select %p144, %s145, %s146
      %p150 = pneg %p144
      %p151 = scmp.eq.s32.totalorder %s29, 3
      %p152 = por %p150, %p151
      %p153 = scmp.ne.s32.totalorder %s145, %s148
      %p154 = scmp.eq.s32.totalorder %s29, 0
      %p155 = por %p153, %p154
      %p156 = scmp.ne.s32.totalorder %s145, %s148
      %p157 = scmp.eq.s32.totalorder %s34, 3
      %p158 = por %p156, %p157
      %p159 = scmp.ne.s32.totalorder %s148, %s149
      %p160 = scmp.eq.s32.totalorder %s34, 0
      %p161 = por %p159, %p160
      %p162 = scmp.ne.s32.totalorder %s148, %s149
      %p163 = scmp.eq.s32.totalorder %s35, 3
      %p164 = por %p162, %p163
      %p166 = scmp.ne.s32.totalorder %s149, %s165
      %p167 = scmp.eq.s32.totalorder %s35, 0
      %p168 = por %p166, %p167
      %s169 = ssub.s32 %s37, %s44
      %p170 = scmp.eq.s32.totalorder %s169, 0
      %s172 = sadd.s32 %s171, 1
      %s173 = scalar_select %p170, %s171, %s172
      %p176 = pneg %p170
      %p177 = scmp.eq.s32.totalorder %s29, 3
      %p178 = por %p176, %p177
      %p179 = scmp.ne.s32.totalorder %s171, %s174
      %p180 = scmp.eq.s32.totalorder %s29, 0
      %p181 = por %p179, %p180
      %p182 = scmp.ne.s32.totalorder %s171, %s174
      %p183 = scmp.eq.s32.totalorder %s34, 3
      %p184 = por %p182, %p183
      %p185 = scmp.ne.s32.totalorder %s174, %s175
      %p186 = scmp.eq.s32.totalorder %s34, 0
      %p187 = por %p185, %p186
      %p188 = scmp.ne.s32.totalorder %s174, %s175
      %p189 = scmp.eq.s32.totalorder %s35, 3
      %p190 = por %p188, %p189
      %p192 = scmp.ne.s32.totalorder %s175, %s191
      %p193 = scmp.eq.s32.totalorder %s35, 0
      %p194 = por %p192, %p193
      %s195 = ssub.s32 %s37, %s44
      %p196 = scmp.eq.s32.totalorder %s195, 0
      %s198 = sadd.s32 %s197, 1
      %s199 = scalar_select %p196, %s197, %s198
      %p202 = pneg %p196
      %p203 = scmp.eq.s32.totalorder %s29, 3
      %p204 = por %p202, %p203
      %p205 = scmp.ne.s32.totalorder %s197, %s200
      %p206 = scmp.eq.s32.totalorder %s29, 0
      %p207 = por %p205, %p206
      %p208 = scmp.ne.s32.totalorder %s197, %s200
      %p209 = scmp.eq.s32.totalorder %s34, 3
      %p210 = por %p208, %p209
      %p211 = scmp.ne.s32.totalorder %s200, %s201
      %p212 = scmp.eq.s32.totalorder %s34, 0
      %p213 = por %p211, %p212
      %p214 = scmp.ne.s32.totalorder %s200, %s201
      %p215 = scmp.eq.s32.totalorder %s35, 3
      %p216 = por %p214, %p215
      %p218 = scmp.ne.s32.totalorder %s201, %s217
      %p219 = scmp.eq.s32.totalorder %s35, 0
      %p220 = por %p218, %p219
      %s221 = ssub.s32 %s37, %s44
      %p222 = scmp.eq.s32.totalorder %s221, 0
      %s224 = sadd.s32 %s223, 1
      %s225 = scalar_select %p222, %s223, %s224
      %p228 = pneg %p222
      %p229 = scmp.eq.s32.totalorder %s29, 3
      %p230 = por %p228, %p229
      %p231 = scmp.ne.s32.totalorder %s223, %s226
      %p232 = scmp.eq.s32.totalorder %s29, 0
      %p233 = por %p231, %p232
      %p234 = scmp.ne.s32.totalorder %s223, %s226
      %p235 = scmp.eq.s32.totalorder %s34, 3
      %p236 = por %p234, %p235
      %p237 = scmp.ne.s32.totalorder %s226, %s227
      %p238 = scmp.eq.s32.totalorder %s34, 0
      %p239 = por %p237, %p238
      %p240 = scmp.ne.s32.totalorder %s226, %s227
      %p241 = scmp.eq.s32.totalorder %s35, 3
      %p242 = por %p240, %p241
      %p244 = scmp.ne.s32.totalorder %s227, %s243
      %p245 = scmp.eq.s32.totalorder %s35, 0
      %p246 = por %p244, %p245
      %s247 = ssub.s32 %s37, %s44
      %p248 = scmp.eq.s32.totalorder %s247, 0
      %s250 = sadd.s32 %s249, 1
      %s251 = scalar_select %p248, %s249, %s250
      %p254 = pneg %p248
      %p255 = scmp.eq.s32.totalorder %s29, 3
      %p256 = por %p254, %p255
      %p257 = scmp.ne.s32.totalorder %s249, %s252
      %p258 = scmp.eq.s32.totalorder %s29, 0
      %p259 = por %p257, %p258
      %p260 = scmp.ne.s32.totalorder %s249, %s252
      %p261 = scmp.eq.s32.totalorder %s34, 3
      %p262 = por %p260, %p261
      %p263 = scmp.ne.s32.totalorder %s252, %s253
      %p264 = scmp.eq.s32.totalorder %s34, 0
      %p265 = por %p263, %p264
      %p266 = scmp.ne.s32.totalorder %s252, %s253
      %p267 = scmp.eq.s32.totalorder %s35, 3
      %p268 = por %p266, %p267
      %p270 = scmp.ne.s32.totalorder %s253, %s269
      %p271 = scmp.eq.s32.totalorder %s35, 0
      %p272 = por %p270, %p271
      %s273 = ssub.s32 %s37, %s44
      %p274 = scmp.eq.s32.totalorder %s273, 0
      %s276 = sadd.s32 %s275, 1
      %s277 = scalar_select %p274, %s275, %s276
      %p280 = pneg %p274
      %p281 = scmp.eq.s32.totalorder %s29, 3
      %p282 = por %p280, %p281
      %p283 = scmp.ne.s32.totalorder %s275, %s278
      %p284 = scmp.eq.s32.totalorder %s29, 0
      %p285 = por %p283, %p284
      %p286 = scmp.ne.s32.totalorder %s275, %s278
      %p287 = scmp.eq.s32.totalorder %s34, 3
      %p288 = por %p286, %p287
      %p289 = scmp.ne.s32.totalorder %s278, %s279
      %p290 = scmp.eq.s32.totalorder %s34, 0
      %p291 = por %p289, %p290
      %p292 = scmp.ne.s32.totalorder %s278, %s279
      %p293 = scmp.eq.s32.totalorder %s35, 3
      %p294 = por %p292, %p293
      %p296 = scmp.ne.s32.totalorder %s279, %s295
      %p297 = scmp.eq.s32.totalorder %s35, 0
      %p298 = por %p296, %p297
      %s299 = ssub.s32 %s37, %s44
      %p300 = scmp.eq.s32.totalorder %s299, 0
      %s302 = sadd.s32 %s301, 1
      %s303 = scalar_select %p300, %s301, %s302
      %p306 = pneg %p300
      %p307 = scmp.eq.s32.totalorder %s29, 3
      %p308 = por %p306, %p307
      %p309 = scmp.ne.s32.totalorder %s301, %s304
      %p310 = scmp.eq.s32.totalorder %s29, 0
      %p311 = por %p309, %p310
      %p312 = scmp.ne.s32.totalorder %s301, %s304
      %p313 = scmp.eq.s32.totalorder %s34, 3
      %p314 = por %p312, %p313
      %p315 = scmp.ne.s32.totalorder %s304, %s305
      %p316 = scmp.eq.s32.totalorder %s34, 0
      %p317 = por %p315, %p316
      %p318 = scmp.ne.s32.totalorder %s304, %s305
      %p319 = scmp.eq.s32.totalorder %s35, 3
      %p320 = por %p318, %p319
      %p322 = scmp.ne.s32.totalorder %s305, %s321
      %p323 = scmp.eq.s32.totalorder %s35, 0
      %p324 = por %p322, %p323
      %s325 = ssub.s32 %s37, %s44
      %p326 = scmp.eq.s32.totalorder %s325, 0
      %s328 = sadd.s32 %s327, 1
      %s329 = scalar_select %p326, %s327, %s328
      %p332 = pneg %p326
      %p333 = scmp.eq.s32.totalorder %s29, 3
      %p334 = por %p332, %p333
      %p335 = scmp.ne.s32.totalorder %s327, %s330
      %p336 = scmp.eq.s32.totalorder %s29, 0
      %p337 = por %p335, %p336
      %p338 = scmp.ne.s32.totalorder %s327, %s330
      %p339 = scmp.eq.s32.totalorder %s34, 3
      %p340 = por %p338, %p339
      %p341 = scmp.ne.s32.totalorder %s330, %s331
      %p342 = scmp.eq.s32.totalorder %s34, 0
      %p343 = por %p341, %p342
      %p344 = scmp.ne.s32.totalorder %s330, %s331
      %p345 = scmp.eq.s32.totalorder %s35, 3
      %p346 = por %p344, %p345
      %p348 = scmp.ne.s32.totalorder %s331, %s347
      %p349 = scmp.eq.s32.totalorder %s35, 0
      %p350 = por %p348, %p349
      %s351 = ssub.s32 %s37, %s44
      %p352 = scmp.eq.s32.totalorder %s351, 0
      %s354 = sadd.s32 %s353, 1
      %s355 = scalar_select %p352, %s353, %s354
      %p358 = pneg %p352
      %p359 = scmp.eq.s32.totalorder %s29, 3
      %p360 = por %p358, %p359
      %p361 = scmp.ne.s32.totalorder %s353, %s356
      %p362 = scmp.eq.s32.totalorder %s29, 0
      %p363 = por %p361, %p362
      %p364 = scmp.ne.s32.totalorder %s353, %s356
      %p365 = scmp.eq.s32.totalorder %s34, 3
      %p366 = por %p364, %p365
      %p367 = scmp.ne.s32.totalorder %s356, %s357
      %p368 = scmp.eq.s32.totalorder %s34, 0
      %p369 = por %p367, %p368
      %p370 = scmp.ne.s32.totalorder %s356, %s357
      %p371 = scmp.eq.s32.totalorder %s35, 3
      %p372 = por %p370, %p371
      %p374 = scmp.ne.s32.totalorder %s357, %s373
      %p375 = scmp.eq.s32.totalorder %s35, 0
      %p376 = por %p374, %p375
      %s377 = ssub.s32 %s37, %s44
      %p378 = scmp.eq.s32.totalorder %s377, 0
      %s380 = sadd.s32 %s379, 1
      %s381 = scalar_select %p378, %s379, %s380
      %p384 = pneg %p378
      %p385 = scmp.eq.s32.totalorder %s29, 3
      %p386 = por %p384, %p385
      %p387 = scmp.ne.s32.totalorder %s379, %s382
      %p388 = scmp.eq.s32.totalorder %s29, 0
      %p389 = por %p387, %p388
      %p390 = scmp.ne.s32.totalorder %s379, %s382
      %p391 = scmp.eq.s32.totalorder %s34, 3
      %p392 = por %p390, %p391
      %p393 = scmp.ne.s32.totalorder %s382, %s383
      %p394 = scmp.eq.s32.totalorder %s34, 0
      %p395 = por %p393, %p394
      %p396 = scmp.ne.s32.totalorder %s382, %s383
      %p397 = scmp.eq.s32.totalorder %s35, 3
      %p398 = por %p396, %p397
      %p400 = scmp.ne.s32.totalorder %s383, %s399
      %p401 = scmp.eq.s32.totalorder %s35, 0
      %p402 = por %p400, %p401
      %s403 = ssub.s32 %s37, %s44
      %p404 = scmp.eq.s32.totalorder %s403, 0
      %s406 = sadd.s32 %s405, 1
      %s407 = scalar_select %p404, %s405, %s406
      %p410 = pneg %p404
      %p411 = scmp.eq.s32.totalorder %s29, 3
      %p412 = por %p410, %p411
      %p413 = scmp.ne.s32.totalorder %s405, %s408
      %p414 = scmp.eq.s32.totalorder %s29, 0
      %p415 = por %p413, %p414
      %p416 = scmp.ne.s32.totalorder %s405, %s408
      %p417 = scmp.eq.s32.totalorder %s34, 3
      %p418 = por %p416, %p417
      %p419 = scmp.ne.s32.totalorder %s408, %s409
      %p420 = scmp.eq.s32.totalorder %s34, 0
      %p421 = por %p419, %p420
      %p422 = scmp.ne.s32.totalorder %s408, %s409
      %p423 = scmp.eq.s32.totalorder %s35, 3
      %p424 = por %p422, %p423
      %p426 = scmp.ne.s32.totalorder %s409, %s425
      %p427 = scmp.eq.s32.totalorder %s35, 0
      %p428 = por %p426, %p427
      %s429 = ssub.s32 %s37, %s44
      %p430 = scmp.eq.s32.totalorder %s429, 0
      %s432 = sadd.s32 %s431, 1
      %s433 = scalar_select %p430, %s431, %s432
      %p436 = pneg %p430
      %p437 = scmp.eq.s32.totalorder %s29, 3
      %p438 = por %p436, %p437
      %p439 = scmp.ne.s32.totalorder %s431, %s434
      %p440 = scmp.eq.s32.totalorder %s29, 0
      %p441 = por %p439, %p440
      %p442 = scmp.ne.s32.totalorder %s431, %s434
      %p443 = scmp.eq.s32.totalorder %s34, 3
      %p444 = por %p442, %p443
      %p445 = scmp.ne.s32.totalorder %s434, %s435
      %p446 = scmp.eq.s32.totalorder %s34, 0
      %p447 = por %p445, %p446
      %p448 = scmp.ne.s32.totalorder %s434, %s435
      %p449 = scmp.eq.s32.totalorder %s35, 3
      %p450 = por %p448, %p449
      %p452 = scmp.ne.s32.totalorder %s435, %s451
      %p453 = scmp.eq.s32.totalorder %s35, 0
      %p454 = por %p452, %p453
      %s456 = sadd.s32 %s455, 1
      %p459 = scmp.eq.s32.totalorder %s29, 3
      %p460 = scmp.ne.s32.totalorder %s455, %s457
      %p461 = scmp.eq.s32.totalorder %s29, 0
      %p462 = por %p460, %p461
      %p463 = scmp.ne.s32.totalorder %s455, %s457
      %p464 = scmp.eq.s32.totalorder %s34, 3
      %p465 = por %p463, %p464
      %p466 = scmp.ne.s32.totalorder %s457, %s458
      %p467 = scmp.eq.s32.totalorder %s34, 0
      %p468 = por %p466, %p467
      %p469 = scmp.ne.s32.totalorder %s457, %s458
      %p470 = scmp.eq.s32.totalorder %s35, 3
      %p471 = por %p469, %p470
      %p473 = scmp.ne.s32.totalorder %s458, %s472
      %p474 = scmp.eq.s32.totalorder %s35, 0
      %p475 = por %p473, %p474
      %s477 = sadd.s32 %s476, 1
      %p480 = scmp.eq.s32.totalorder %s29, 3
      %p481 = scmp.ne.s32.totalorder %s476, %s478
      %p482 = scmp.eq.s32.totalorder %s29, 0
      %p483 = por %p481, %p482
      %p484 = scmp.ne.s32.totalorder %s476, %s478
      %p485 = scmp.eq.s32.totalorder %s34, 3
      %p486 = por %p484, %p485
      %p487 = scmp.ne.s32.totalorder %s478, %s479
      %p488 = scmp.eq.s32.totalorder %s34, 0
      %p489 = por %p487, %p488
      %p490 = scmp.ne.s32.totalorder %s478, %s479
      %p491 = scmp.eq.s32.totalorder %s35, 3
      %p492 = por %p490, %p491
      %p494 = scmp.ne.s32.totalorder %s479, %s493
      %p495 = scmp.eq.s32.totalorder %s35, 0
      %p496 = por %p494, %p495
      %s498 = sadd.s32 %s497, 1
      %p501 = scmp.eq.s32.totalorder %s29, 3
      %p502 = scmp.ne.s32.totalorder %s497, %s499
      %p503 = scmp.eq.s32.totalorder %s29, 0
      %p504 = por %p502, %p503
      %p505 = scmp.ne.s32.totalorder %s497, %s499
      %p506 = scmp.eq.s32.totalorder %s34, 3
      %p507 = por %p505, %p506
      %p508 = scmp.ne.s32.totalorder %s499, %s500
      %p509 = scmp.eq.s32.totalorder %s34, 0
      %p510 = por %p508, %p509
      %p511 = scmp.ne.s32.totalorder %s499, %s500
      %p512 = scmp.eq.s32.totalorder %s35, 3
      %p513 = por %p511, %p512
      %p515 = scmp.ne.s32.totalorder %s500, %s514
      %p516 = scmp.eq.s32.totalorder %s35, 0
      %p517 = por %p515, %p516
      %s519 = sadd.s32 %s518, 1
      %p522 = scmp.eq.s32.totalorder %s29, 3
      %p523 = scmp.ne.s32.totalorder %s518, %s520
      %p524 = scmp.eq.s32.totalorder %s29, 0
      %p525 = por %p523, %p524
      %p526 = scmp.ne.s32.totalorder %s518, %s520
      %p527 = scmp.eq.s32.totalorder %s34, 3
      %p528 = por %p526, %p527
      %p529 = scmp.ne.s32.totalorder %s520, %s521
      %p530 = scmp.eq.s32.totalorder %s34, 0
      %p531 = por %p529, %p530
      %p532 = scmp.ne.s32.totalorder %s520, %s521
      %p533 = scmp.eq.s32.totalorder %s35, 3
      %p534 = por %p532, %p533
      %p536 = scmp.ne.s32.totalorder %s521, %s535
      %p537 = scmp.eq.s32.totalorder %s35, 0
      %p538 = por %p536, %p537
      %s539 = ssub.s32 %s36, %s48
      %p540 = scmp.eq.s32.totalorder %s539, 0
      %s542 = sadd.s32 %s541, 1
      %s543 = scalar_select %p540, %s541, %s542
      %p546 = pneg %p540
      %p547 = scmp.eq.s32.totalorder %s29, 3
      %p548 = por %p546, %p547
      %p549 = scmp.ne.s32.totalorder %s541, %s544
      %p550 = scmp.eq.s32.totalorder %s29, 0
      %p551 = por %p549, %p550
      %p552 = scmp.ne.s32.totalorder %s541, %s544
      %p553 = scmp.eq.s32.totalorder %s34, 3
      %p554 = por %p552, %p553
      %p555 = scmp.ne.s32.totalorder %s544, %s545
      %p556 = scmp.eq.s32.totalorder %s34, 0
      %p557 = por %p555, %p556
      %p558 = scmp.ne.s32.totalorder %s544, %s545
      %p559 = scmp.eq.s32.totalorder %s35, 3
      %p560 = por %p558, %p559
      %p562 = scmp.ne.s32.totalorder %s545, %s561
      %p563 = scmp.eq.s32.totalorder %s35, 0
      %p564 = por %p562, %p563
      %p565 = scmp.le.s32.totalorder 1, %s29
      %p566 = scmp.lt.s32.totalorder %s29, 5
      %p567 = pnand %p565, %p566
      %p568 = pneg %p567
      // Predicated region
      $region9: #{pretrained_bert_forward.1} parent=5 // pred_check
        _
      $region10: #{pretrained_bert_forward.1} parent=5 // pred_check_branch
        %570 = sbr.rel (%p567) target = $region12
      $region11: #{pretrained_bert_forward.1} parent=5 // pred_region
        %s571 = ssub.s32 %s29, 1
        // Predicated region
        $region13: #{pretrained_bert_forward.1} parent=11 // pred_check
          %p572 = pneg %p114
        $region14: #{pretrained_bert_forward.1} parent=11 // pred_check_branch
          %574 = sbr.rel (%p572) target = $region16
        $region15: #{pretrained_bert_forward.1} parent=11 // pred_region
          _
        $region16: #{pretrained_bert_forward.1} parent=11 // pred_fallthru
          _
        // Predicated region
        $region17: #{pretrained_bert_forward.1} parent=11 // pred_check
          %p575 = pneg %p135
        $region18: #{pretrained_bert_forward.1} parent=11 // pred_check_branch
          %577 = sbr.rel (%p575) target = $region20
        $region19: #{pretrained_bert_forward.1} parent=11 // pred_region
          _
        $region20: #{pretrained_bert_forward.1} parent=11 // pred_fallthru
          _
        // Predicated region
        $region21: #{pretrained_bert_forward.1} parent=11 // pred_check
          %p578 = pneg %p468
        $region22: #{pretrained_bert_forward.1} parent=11 // pred_check_branch
          %580 = sbr.rel (%p578) target = $region24
        $region23: #{pretrained_bert_forward.1} parent=11 // pred_region
          _
        $region24: #{pretrained_bert_forward.1} parent=11 // pred_fallthru
          _
        // Predicated region
        $region25: #{pretrained_bert_forward.1} parent=11 // pred_check
          %p581 = pneg %p489
        $region26: #{pretrained_bert_forward.1} parent=11 // pred_check_branch
          %583 = sbr.rel (%p581) target = $region28
        $region27: #{pretrained_bert_forward.1} parent=11 // pred_region
          _
        $region28: #{pretrained_bert_forward.1} parent=11 // pred_fallthru
          _
        // Predicated region
        $region29: #{pretrained_bert_forward.1} parent=11 // pred_check
          %p584 = pneg %p510
        $region30: #{pretrained_bert_forward.1} parent=11 // pred_check_branch
          %586 = sbr.rel (%p584) target = $region32
        $region31: #{pretrained_bert_forward.1} parent=11 // pred_region
          _
        $region32: #{pretrained_bert_forward.1} parent=11 // pred_fallthru
          _
        // Predicated region
        $region33: #{pretrained_bert_forward.1} parent=11 // pred_check
          %p587 = pneg %p531
        $region34: #{pretrained_bert_forward.1} parent=11 // pred_check_branch
          %589 = sbr.rel (%p587) target = $region36
        $region35: #{pretrained_bert_forward.1} parent=11 // pred_region
          _
        $region36: #{pretrained_bert_forward.1} parent=11 // pred_fallthru
          _
      $region12: #{pretrained_bert_forward.1} parent=5 // pred_fallthru
        _
      %p590 = scmp.lt.s32.totalorder %s29, 4
      // Predicated region
      $region37: #{pretrained_bert_forward.1} parent=5 // pred_check
        %p591 = pneg %p590
      $region38: #{pretrained_bert_forward.1} parent=5 // pred_check_branch
        %593 = sbr.rel (%p591) target = $region40
      $region39: #{pretrained_bert_forward.1} parent=5 // pred_region
        // Predicated region
        $region41: #{pretrained_bert_forward.1} parent=39 // pred_check
          %p594 = pneg %p61
        $region42: #{pretrained_bert_forward.1} parent=39 // pred_check_branch
          %596 = sbr.rel (%p594) target = $region44
        $region43: #{pretrained_bert_forward.1} parent=39 // pred_region
          %p597 = scmp.lt.s32.totalorder %s36, 1
          %s598 = scalar_select %p597, %s36, 1
          %s599 = smul.addr %s598, 8
          %s600 = scalar_lea.vmem %s0, %s599
        $region44: #{pretrained_bert_forward.1} parent=39 // pred_fallthru
          _
        // Predicated region
        $region45: #{pretrained_bert_forward.1} parent=39 // pred_check
          %p601 = pneg %p87
        $region46: #{pretrained_bert_forward.1} parent=39 // pred_check_branch
          %603 = sbr.rel (%p601) target = $region48
        $region47: #{pretrained_bert_forward.1} parent=39 // pred_region
          %p604 = scmp.lt.s32.totalorder %s36, 1
          %s605 = scalar_select %p604, %s36, 1
          %s606 = scalar_lea.vmem %s1, %s605
        $region48: #{pretrained_bert_forward.1} parent=39 // pred_fallthru
          _
        // Predicated region
        $region49: #{pretrained_bert_forward.1} parent=39 // pred_check
          %p607 = pneg %p155
        $region50: #{pretrained_bert_forward.1} parent=39 // pred_check_branch
          %609 = sbr.rel (%p607) target = $region52
        $region51: #{pretrained_bert_forward.1} parent=39 // pred_region
          %p610 = scmp.lt.s32.totalorder %s37, 1
          %s611 = scalar_select %p610, %s37, 1
          %s612 = smul.addr %s611, 4
          %s613 = smul.addr %s612, 8
          %s614 = scalar_lea.vmem %s4, %s613
        $region52: #{pretrained_bert_forward.1} parent=39 // pred_fallthru
          _
        // Predicated region
        $region53: #{pretrained_bert_forward.1} parent=39 // pred_check
          %p615 = pneg %p181
        $region54: #{pretrained_bert_forward.1} parent=39 // pred_check_branch
          %617 = sbr.rel (%p615) target = $region56
        $region55: #{pretrained_bert_forward.1} parent=39 // pred_region
          %p618 = scmp.lt.s32.totalorder %s37, 1
          %s619 = scalar_select %p618, %s37, 1
          %s620 = scalar_lea.vmem %s5, %s619
        $region56: #{pretrained_bert_forward.1} parent=39 // pred_fallthru
          _
        // Predicated region
        $region57: #{pretrained_bert_forward.1} parent=39 // pred_check
          %p621 = pneg %p207
        $region58: #{pretrained_bert_forward.1} parent=39 // pred_check_branch
          %623 = sbr.rel (%p621) target = $region60
        $region59: #{pretrained_bert_forward.1} parent=39 // pred_region
          %p624 = scmp.lt.s32.totalorder %s37, 1
          %s625 = scalar_select %p624, %s37, 1
          %s626 = smul.addr %s625, 4
          %s627 = smul.addr %s626, 8
          %s628 = scalar_lea.vmem %s6, %s627
        $region60: #{pretrained_bert_forward.1} parent=39 // pred_fallthru
          _
        // Predicated region
        $region61: #{pretrained_bert_forward.1} parent=39 // pred_check
          %p629 = pneg %p233
        $region62: #{pretrained_bert_forward.1} parent=39 // pred_check_branch
          %631 = sbr.rel (%p629) target = $region64
        $region63: #{pretrained_bert_forward.1} parent=39 // pred_region
          %p632 = scmp.lt.s32.totalorder %s37, 1
          %s633 = scalar_select %p632, %s37, 1
          %s634 = scalar_lea.vmem %s7, %s633
        $region64: #{pretrained_bert_forward.1} parent=39 // pred_fallthru
          _
        // Predicated region
        $region65: #{pretrained_bert_forward.1} parent=39 // pred_check
          %p635 = pneg %p259
        $region66: #{pretrained_bert_forward.1} parent=39 // pred_check_branch
          %637 = sbr.rel (%p635) target = $region68
        $region67: #{pretrained_bert_forward.1} parent=39 // pred_region
          %p638 = scmp.lt.s32.totalorder %s37, 1
          %s639 = scalar_select %p638, %s37, 1
          %s640 = scalar_lea.vmem %s8, %s639
        $region68: #{pretrained_bert_forward.1} parent=39 // pred_fallthru
          _
        // Predicated region
        $region69: #{pretrained_bert_forward.1} parent=39 // pred_check
          %p641 = pneg %p285
        $region70: #{pretrained_bert_forward.1} parent=39 // pred_check_branch
          %643 = sbr.rel (%p641) target = $region72
        $region71: #{pretrained_bert_forward.1} parent=39 // pred_region
          %p644 = scmp.lt.s32.totalorder %s37, 1
          %s645 = scalar_select %p644, %s37, 1
          %s646 = scalar_lea.vmem %s9, %s645
        $region72: #{pretrained_bert_forward.1} parent=39 // pred_fallthru
          _
        // Predicated region
        $region73: #{pretrained_bert_forward.1} parent=39 // pred_check
          %p647 = pneg %p311
        $region74: #{pretrained_bert_forward.1} parent=39 // pred_check_branch
          %649 = sbr.rel (%p647) target = $region76
        $region75: #{pretrained_bert_forward.1} parent=39 // pred_region
          %p650 = scmp.lt.s32.totalorder %s37, 1
          %s651 = scalar_select %p650, %s37, 1
          %s652 = smul.addr %s651, 4
          %s653 = smul.addr %s652, 8
          %s654 = scalar_lea.vmem %s10, %s653
        $region76: #{pretrained_bert_forward.1} parent=39 // pred_fallthru
          _
        // Predicated region
        $region77: #{pretrained_bert_forward.1} parent=39 // pred_check
          %p655 = pneg %p337
        $region78: #{pretrained_bert_forward.1} parent=39 // pred_check_branch
          %657 = sbr.rel (%p655) target = $region80
        $region79: #{pretrained_bert_forward.1} parent=39 // pred_region
          %p658 = scmp.lt.s32.totalorder %s37, 1
          %s659 = scalar_select %p658, %s37, 1
          %s660 = scalar_lea.vmem %s11, %s659
        $region80: #{pretrained_bert_forward.1} parent=39 // pred_fallthru
          _
        // Predicated region
        $region81: #{pretrained_bert_forward.1} parent=39 // pred_check
          %p661 = pneg %p363
        $region82: #{pretrained_bert_forward.1} parent=39 // pred_check_branch
          %663 = sbr.rel (%p661) target = $region84
        $region83: #{pretrained_bert_forward.1} parent=39 // pred_region
          %p664 = scmp.lt.s32.totalorder %s37, 1
          %s665 = scalar_select %p664, %s37, 1
          %s666 = smul.addr %s665, 8
          %s667 = smul.addr %s666, 8
          %s668 = scalar_lea.vmem %s12, %s667
        $region84: #{pretrained_bert_forward.1} parent=39 // pred_fallthru
          _
        // Predicated region
        $region85: #{pretrained_bert_forward.1} parent=39 // pred_check
          %p669 = pneg %p389
        $region86: #{pretrained_bert_forward.1} parent=39 // pred_check_branch
          %671 = sbr.rel (%p669) target = $region88
        $region87: #{pretrained_bert_forward.1} parent=39 // pred_region
          %p672 = scmp.lt.s32.totalorder %s37, 1
          %s673 = scalar_select %p672, %s37, 1
          %s674 = scalar_lea.vmem %s13, %s673
        $region88: #{pretrained_bert_forward.1} parent=39 // pred_fallthru
          _
        // Predicated region
        $region89: #{pretrained_bert_forward.1} parent=39 // pred_check
          %p675 = pneg %p415
        $region90: #{pretrained_bert_forward.1} parent=39 // pred_check_branch
          %677 = sbr.rel (%p675) target = $region92
        $region91: #{pretrained_bert_forward.1} parent=39 // pred_region
          %p678 = scmp.lt.s32.totalorder %s37, 1
          %s679 = scalar_select %p678, %s37, 1
          %s680 = scalar_lea.vmem %s14, %s679
        $region92: #{pretrained_bert_forward.1} parent=39 // pred_fallthru
          _
        // Predicated region
        $region93: #{pretrained_bert_forward.1} parent=39 // pred_check
          %p681 = pneg %p441
        $region94: #{pretrained_bert_forward.1} parent=39 // pred_check_branch
          %683 = sbr.rel (%p681) target = $region96
        $region95: #{pretrained_bert_forward.1} parent=39 // pred_region
          %p684 = scmp.lt.s32.totalorder %s37, 1
          %s685 = scalar_select %p684, %s37, 1
          %s686 = scalar_lea.vmem %s15, %s685
        $region96: #{pretrained_bert_forward.1} parent=39 // pred_fallthru
          _
      $region40: #{pretrained_bert_forward.1} parent=5 // pred_fallthru
        _
      %p687 = scmp.le.s32.totalorder 1, %s29
      %p688 = scmp.lt.s32.totalorder %s29, 5
      %p689 = pnand %p687, %p688
      %p690 = pneg %p689
      // Predicated region
      $region97: #{pretrained_bert_forward.1} parent=5 // pred_check
        _
      $region98: #{pretrained_bert_forward.1} parent=5 // pred_check_branch
        %692 = sbr.rel (%p689) target = $region100
      $region99: #{pretrained_bert_forward.1} parent=5 // pred_region
        %s693 = ssub.s32 %s29, 1
        %p694 = scmp.lt.s32.totalorder %s38, 1
        %s695 = scalar_select %p694, %s38, 1
        %s696 = smul.addr %s695, 8
        %s697 = scalar_lea.vmem %s0, %s696
        %p698 = pneg %p67
        %p699 = pneg %p64
        %p700 = scmp.lt.s32.totalorder %s38, 1
        %s701 = scalar_select %p700, %s38, 1
        %s702 = scalar_lea.vmem %s1, %s701
        %p703 = pneg %p93
        %p704 = pneg %p90
        %p705 = pneg %p114
        %p706 = pneg %p111
        %p707 = pneg %p135
        %p708 = pneg %p132
        %p709 = scmp.lt.s32.totalorder %s39, 1
        %s710 = scalar_select %p709, %s39, 1
        %s711 = smul.addr %s710, 4
        %s712 = smul.addr %s711, 8
        %s713 = scalar_lea.vmem %s4, %s712
        %p714 = pneg %p161
        %p715 = pneg %p158
        %p716 = scmp.lt.s32.totalorder %s39, 1
        %s717 = scalar_select %p716, %s39, 1
        %s718 = scalar_lea.vmem %s5, %s717
        %p719 = pneg %p187
        %p720 = pneg %p184
        %p721 = scmp.lt.s32.totalorder %s39, 1
        %s722 = scalar_select %p721, %s39, 1
        %s723 = smul.addr %s722, 4
        %s724 = smul.addr %s723, 8
        %s725 = scalar_lea.vmem %s6, %s724
        %p726 = pneg %p213
        %p727 = pneg %p210
        %p728 = scmp.lt.s32.totalorder %s39, 1
        %s729 = scalar_select %p728, %s39, 1
        %s730 = scalar_lea.vmem %s7, %s729
        %p731 = pneg %p239
        %p732 = pneg %p236
        %p733 = scmp.lt.s32.totalorder %s39, 1
        %s734 = scalar_select %p733, %s39, 1
        %s735 = scalar_lea.vmem %s8, %s734
        %p736 = pneg %p265
        %p737 = pneg %p262
        %p738 = scmp.lt.s32.totalorder %s39, 1
        %s739 = scalar_select %p738, %s39, 1
        %s740 = scalar_lea.vmem %s9, %s739
        %p741 = pneg %p291
        %p742 = pneg %p288
        %p743 = scmp.lt.s32.totalorder %s39, 1
        %s744 = scalar_select %p743, %s39, 1
        %s745 = smul.addr %s744, 4
        %s746 = smul.addr %s745, 8
        %s747 = scalar_lea.vmem %s10, %s746
        %p748 = pneg %p317
        %p749 = pneg %p314
        %p750 = scmp.lt.s32.totalorder %s39, 1
        %s751 = scalar_select %p750, %s39, 1
        %s752 = scalar_lea.vmem %s11, %s751
        %p753 = pneg %p343
        %p754 = pneg %p340
        %p755 = scmp.lt.s32.totalorder %s39, 1
        %s756 = scalar_select %p755, %s39, 1
        %s757 = smul.addr %s756, 8
        %s758 = smul.addr %s757, 8
        %s759 = scalar_lea.vmem %s12, %s758
        %p760 = pneg %p369
        %p761 = pneg %p366
        %p762 = scmp.lt.s32.totalorder %s39, 1
        %s763 = scalar_select %p762, %s39, 1
        %s764 = scalar_lea.vmem %s13, %s763
        %p765 = pneg %p395
        %p766 = pneg %p392
        %p767 = scmp.lt.s32.totalorder %s39, 1
        %s768 = scalar_select %p767, %s39, 1
        %s769 = scalar_lea.vmem %s14, %s768
        %p770 = pneg %p421
        %p771 = pneg %p418
        %p772 = scmp.lt.s32.totalorder %s39, 1
        %s773 = scalar_select %p772, %s39, 1
        %s774 = scalar_lea.vmem %s15, %s773
        %p775 = pneg %p447
        %p776 = pneg %p444
        %p777 = pneg %p468
        %p778 = pneg %p465
        %p779 = pneg %p489
        %p780 = pneg %p486
        %p781 = pneg %p510
        %p782 = pneg %p507
        %p783 = pneg %p531
        %p784 = pneg %p528
        %p785 = pneg %p557
        %p786 = pneg %p554
        %s787 = sand.u32 %s544, 1
        %s788 = scalar_lea.sflag [#allocation4], %s787
        %s789 = sand.u32 %s544, 1
        %s790 = scalar_lea.vmem [#allocation3], %s789
        %p791 = scmp.lt.s32.totalorder %s38, 1
        %s792 = scalar_select %p791, %s38, 1
        %s793 = smul.addr %s792, 8
        %s794 = scalar_lea.vmem %s0, %s793
        %p795 = scmp.lt.s32.totalorder %s38, 1
        %s796 = scalar_select %p795, %s38, 1
        %s797 = scalar_lea.vmem %s1, %s796
        %p798 = scmp.lt.s32.totalorder %s39, 1
        %s799 = scalar_select %p798, %s39, 1
        %s800 = smul.addr %s799, 4
        %s801 = smul.addr %s800, 8
        %s802 = scalar_lea.vmem %s4, %s801
        %p803 = scmp.lt.s32.totalorder %s39, 1
        %s804 = scalar_select %p803, %s39, 1
        %s805 = scalar_lea.vmem %s5, %s804
        %p806 = scmp.lt.s32.totalorder %s39, 1
        %s807 = scalar_select %p806, %s39, 1
        %s808 = smul.addr %s807, 4
        %s809 = smul.addr %s808, 8
        %s810 = scalar_lea.vmem %s6, %s809
        %p811 = scmp.lt.s32.totalorder %s39, 1
        %s812 = scalar_select %p811, %s39, 1
        %s813 = scalar_lea.vmem %s7, %s812
        %p814 = scmp.lt.s32.totalorder %s39, 1
        %s815 = scalar_select %p814, %s39, 1
        %s816 = scalar_lea.vmem %s8, %s815
        %p817 = scmp.lt.s32.totalorder %s39, 1
        %s818 = scalar_select %p817, %s39, 1
        %s819 = scalar_lea.vmem %s9, %s818
        %p820 = scmp.lt.s32.totalorder %s39, 1
        %s821 = scalar_select %p820, %s39, 1
        %s822 = smul.addr %s821, 4
        %s823 = smul.addr %s822, 8
        %s824 = scalar_lea.vmem %s10, %s823
        %p825 = scmp.lt.s32.totalorder %s39, 1
        %s826 = scalar_select %p825, %s39, 1
        %s827 = scalar_lea.vmem %s11, %s826
        %p828 = scmp.lt.s32.totalorder %s39, 1
        %s829 = scalar_select %p828, %s39, 1
        %s830 = smul.addr %s829, 8
        %s831 = smul.addr %s830, 8
        %s832 = scalar_lea.vmem %s12, %s831
        %p833 = scmp.lt.s32.totalorder %s39, 1
        %s834 = scalar_select %p833, %s39, 1
        %s835 = scalar_lea.vmem %s13, %s834
        %p836 = scmp.lt.s32.totalorder %s39, 1
        %s837 = scalar_select %p836, %s39, 1
        %s838 = scalar_lea.vmem %s14, %s837
        %p839 = scmp.lt.s32.totalorder %s39, 1
        %s840 = scalar_select %p839, %s39, 1
        %s841 = scalar_lea.vmem %s15, %s840
        %p842 = scmp.eq.s32.totalorder %s39, 0
        // Predicated region
        $region101: #{pretrained_bert_forward.1} parent=99 // pred_check
          %p843 = pneg %p842
        $region102: #{pretrained_bert_forward.1} parent=99 // pred_check_branch
          %845 = sbr.rel (%p843) target = $region104
        $region103: #{pretrained_bert_forward.1} parent=99 // pred_region
          %v846 = vld [vmem:[%s794] sm:$0xff]
          %v847 = vld [vmem:[%s2] sm:$0x1]
          %v848 = vld [vmem:[%s3] sm:$0x1]
          %vm849 = vcmask 261120
          %v850 = vsel %vm849, %v846, 0.0
          %851 = vadd.xlane.f32.xlu0 %v850
          %v852 = vpop.xlane.xlu0 %851
          %v853 = vrcp.pop 32.0
          %v854 = vmul.f32 32.0, %v853
          %v855 = vsub.f32 1.0, %v854
          %v856 = vmul.f32 %v853, %v855
          %v857 = vadd.f32 %v853, %v856
          %vm858 = vweird.f32 %v853
          %v859 = vsel %vm858, %v853, %v857
          %v860 = vmul.f32 %v852, %v859
          %v861 = vsub.f32 %v846, %v860
          %v862 = vmul.f32 %v861, %v861
          %v863 = vsel %vm849, %v862, 0.0
          %864 = vadd.xlane.f32.xlu0 %v863
          %v865 = vpop.xlane.xlu0 %864
          %v866 = vmul.f32 %v865, %v859
          %v867 = vadd.f32 %v866, 1e-12
          %v868 = vrsqrt.pop %v867
          %v869 = vmul.f32 %v868, %v867
          %v870 = vmul.f32 %v869, %v868
          %v871 = vmul.f32 0.5, %v870
          %v872 = vsub.f32 1.5, %v871
          %v873 = vmul.f32 %v868, %v872
          %vm874 = vweird.f32 %v867
          %vm875 = vweird.f32 %v868
          %vm876 = vmor %vm874, %vm875
          %v877 = vsel %vm876, %v868, %v873
          %v878 = vmul.f32 %v861, %v877
          %v880 = vperm.slane %v847, 0
          %v882 = vmul.f32 %v878, %v880
          %v884 = vperm.slane %v848, 0
          %v886 = vadd.f32 %v882, %v884
          %887 = vst.msk [vmem:[#allocation2] sm:$0xff] %vm849, %v886
        $region104: #{pretrained_bert_forward.1} parent=99 // pred_fallthru
          _
        %v888 = vld [vmem:[#allocation2] sm:$0xff]
        %v889 = vld [vmem:[%s797] sm:$0x1]
        %v890 = vld [vmem:[%s802] sm:$0xff]
        %v891 = vld [vmem:[%s802 + $0x8] sm:$0xff]
        %v892 = vld [vmem:[%s802 + $0x10] sm:$0xff]
        %v893 = vld [vmem:[%s802 + $0x18] sm:$0xff]
        %v894 = vld [vmem:[%s805] sm:$0x1]
        %v896 = vperm.slane %v894, 0
        %vm898 = vcmask 261120
        %v900 = vsel %vm898, %v888, 0
        %902 = vmatpush.msra.mxu0 0.0
        %903 = vmatpush.msra.mxu0 0.0
        %904 = vmatpush.msra.mxu0 0.0
        %905 = vmatpush.msra.mxu0 0.0
        %906 = vmatpush.msra.mxu0 0.0
        %907 = vmatpush.msra.mxu0 0.0
        %908 = vmatpush.msra.mxu0 0.0
        %909 = vmatpush.msra.mxu0 0.0
        %910 = vmatpush.msra.mxu0 0.0
        %911 = vmatpush.msra.mxu0 0.0
        %912 = vmatpush.msra.mxu0 0.0
        %913 = vmatpush.msra.mxu0 0.0
        %914 = vmatpush.msra.mxu0 %v893
        %915 = vmatpush.msra.mxu0 %v892
        %916 = vmatpush.msra.mxu0 %v891
        %917 = vmatpush.msra.mxu0 %v890
        %918 = vmatmul.f32.gmra.mxu0 %v900
        %v919 = vpop.f32.mrf.mxu0
        %v920 = vadd.f32 %v896, %v919
        %921 = vdwg.mxu0
        %923 = vrot.lane.b32.xlu0 %v920, 96
        %v924 = vpop.permute.xlu0 %923
        %vm925 = vcmask 130048
        %v926 = vsel %vm925, %v920, 0
        %v928 = vsel %vm925, %v924, 0
        %930 = vmatpush.xpose.msra.mxu0 0.0
        %931 = vmatpush.xpose.msra.mxu0 0.0
        %932 = vmatpush.xpose.msra.mxu0 0.0
        %933 = vmatpush.xpose.msra.mxu0 0.0
        %934 = vmatpush.xpose.msra.mxu0 0.0
        %935 = vmatpush.xpose.msra.mxu0 0.0
        %936 = vmatpush.xpose.msra.mxu0 0.0
        %937 = vmatpush.xpose.msra.mxu0 0.0
        %938 = vmatpush.xpose.msra.mxu0 0.0
        %939 = vmatpush.xpose.msra.mxu0 0.0
        %940 = vmatpush.xpose.msra.mxu0 0.0
        %941 = vmatpush.xpose.msra.mxu0 0.0
        %942 = vmatpush.xpose.msra.mxu0 0.0
        %943 = vmatpush.xpose.msra.mxu0 0.0
        %944 = vmatpush.xpose.msra.mxu0 0.0
        %945 = vmatpush.xpose.msra.mxu0 %v928
        %946 = vmatmul.f32.gmra.mxu0 %v926
        %v947 = vpop.f32.mrf.mxu0
        %v948 = vadd.f32 0.0, %v947
        %949 = vdwg.mxu0
        %v950 = vmul.f32 %v948, 0.25
        %v952 = vperm.slane %v889, 0
        %v954 = vadd.f32 %v950, %v952
        %vm955 = vcmask 64512
        %v956 = vsel %vm955, %v954, -inf
        %957 = vmax.xlane.f32.xlu0 %v956
        %v958 = vpop.xlane.xlu0 %957
        %v959 = vsub.f32 %v954, %v958
        %v960 = vmul.f32 %v959, 1.442695
        %v961 = vpow.pop %v960
        %v962 = vsel %vm955, %v961, 0.0
        %963 = vadd.xlane.f32.xlu0 %v962
        %v964 = vpop.xlane.xlu0 %963
        %v965 = vrcp.pop %v964
        %v966 = vmul.f32 %v961, %v965
        %967 = vrot.lane.b32.xlu0 %v920, 64
        %v968 = vpop.permute.xlu0 %967
        %v971 = vsel %vm955, %v966, 0
        %973 = vmatpush.msra.mxu0 0.0
        %974 = vmatpush.msra.mxu0 0.0
        %975 = vmatpush.msra.mxu0 0.0
        %976 = vmatpush.msra.mxu0 0.0
        %977 = vmatpush.msra.mxu0 0.0
        %978 = vmatpush.msra.mxu0 0.0
        %979 = vmatpush.msra.mxu0 0.0
        %980 = vmatpush.msra.mxu0 0.0
        %981 = vmatpush.msra.mxu0 0.0
        %982 = vmatpush.msra.mxu0 0.0
        %983 = vmatpush.msra.mxu0 0.0
        %984 = vmatpush.msra.mxu0 0.0
        %985 = vmatpush.msra.mxu0 0.0
        %986 = vmatpush.msra.mxu0 0.0
        %987 = vmatpush.msra.mxu0 0.0
        %988 = vmatpush.msra.mxu0 %v968
        %989 = vmatmul.f32.gmra.mxu0 %v971
        %v990 = vpop.f32.mrf.mxu0
        %v991 = vadd.f32 0.0, %v990
        %992 = vdwg.mxu0
        %v993 = vld [vmem:[%s810] sm:$0xff]
        %v994 = vld [vmem:[%s810 + $0x8] sm:$0xff]
        %995 = vrot.lane.b32.xlu0 %v920, 112
        %v996 = vpop.permute.xlu0 %995
        %997 = vrot.lane.b32.xlu0 %v920, 80
        %v998 = vpop.permute.xlu0 %997
        %v999 = vsel %vm925, %v996, 0
        %v1001 = vsel %vm925, %v998, 0
        %1003 = vmatpush.xpose.msra.mxu0 0.0
        %1004 = vmatpush.xpose.msra.mxu0 0.0
        %1005 = vmatpush.xpose.msra.mxu0 0.0
        %1006 = vmatpush.xpose.msra.mxu0 0.0
        %1007 = vmatpush.xpose.msra.mxu0 0.0
        %1008 = vmatpush.xpose.msra.mxu0 0.0
        %1009 = vmatpush.xpose.msra.mxu0 0.0
        %1010 = vmatpush.xpose.msra.mxu0 0.0
        %1011 = vmatpush.xpose.msra.mxu0 0.0
        %1012 = vmatpush.xpose.msra.mxu0 0.0
        %1013 = vmatpush.xpose.msra.mxu0 0.0
        %1014 = vmatpush.xpose.msra.mxu0 0.0
        %1015 = vmatpush.xpose.msra.mxu0 0.0
        %1016 = vmatpush.xpose.msra.mxu0 0.0
        %1017 = vmatpush.xpose.msra.mxu0 0.0
        %1018 = vmatpush.xpose.msra.mxu0 %v1001
        %1019 = vmatmul.f32.gmra.mxu0 %v999
        %v1020 = vpop.f32.mrf.mxu0
        %v1021 = vadd.f32 0.0, %v1020
        %1022 = vdwg.mxu0
        %v1023 = vmul.f32 %v1021, 0.25
        %v1024 = vadd.f32 %v1023, %v952
        %v1025 = vsel %vm955, %v1024, -inf
        %1026 = vmax.xlane.f32.xlu0 %v1025
        %v1027 = vpop.xlane.xlu0 %1026
        %v1028 = vsub.f32 %v1024, %v1027
        %v1029 = vmul.f32 %v1028, 1.442695
        %v1030 = vpow.pop %v1029
        %v1031 = vsel %vm955, %v1030, 0.0
        %1032 = vadd.xlane.f32.xlu0 %v1031
        %v1033 = vpop.xlane.xlu0 %1032
        %v1034 = vrcp.pop %v1033
        %v1035 = vmul.f32 %v1030, %v1034
        %1036 = vrot.lane.b32.xlu0 %v920, 48
        %v1037 = vpop.permute.xlu0 %1036
        %v1040 = vsel %vm955, %v1035, 0
        %1042 = vmatpush.msra.mxu0 0.0
        %1043 = vmatpush.msra.mxu0 0.0
        %1044 = vmatpush.msra.mxu0 0.0
        %1045 = vmatpush.msra.mxu0 0.0
        %1046 = vmatpush.msra.mxu0 0.0
        %1047 = vmatpush.msra.mxu0 0.0
        %1048 = vmatpush.msra.mxu0 0.0
        %1049 = vmatpush.msra.mxu0 0.0
        %1050 = vmatpush.msra.mxu0 0.0
        %1051 = vmatpush.msra.mxu0 0.0
        %1052 = vmatpush.msra.mxu0 0.0
        %1053 = vmatpush.msra.mxu0 0.0
        %1054 = vmatpush.msra.mxu0 0.0
        %1055 = vmatpush.msra.mxu0 0.0
        %1056 = vmatpush.msra.mxu0 0.0
        %1057 = vmatpush.msra.mxu0 %v1037
        %1058 = vmatmul.f32.gmra.mxu0 %v1040
        %v1059 = vpop.f32.mrf.mxu0
        %v1060 = vadd.f32 0.0, %v1059
        %1061 = vdwg.mxu0
        %v1062 = vld [vmem:[%s810 + $0x10] sm:$0xff]
        %v1063 = vld [vmem:[%s810 + $0x18] sm:$0xff]
        %v1065 = vsel %vm925, %v1060, 0
        %1067 = vmatpush.msra.mxu0 0.0
        %1068 = vmatpush.msra.mxu0 0.0
        %1069 = vmatpush.msra.mxu0 0.0
        %1070 = vmatpush.msra.mxu0 0.0
        %1071 = vmatpush.msra.mxu0 0.0
        %1072 = vmatpush.msra.mxu0 0.0
        %1073 = vmatpush.msra.mxu0 0.0
        %1074 = vmatpush.msra.mxu0 0.0
        %1075 = vmatpush.msra.mxu0 0.0
        %1076 = vmatpush.msra.mxu0 0.0
        %1077 = vmatpush.msra.mxu0 0.0
        %1078 = vmatpush.msra.mxu0 0.0
        %1079 = vmatpush.msra.mxu0 0.0
        %1080 = vmatpush.msra.mxu0 0.0
        %1081 = vmatpush.msra.mxu0 %v1063
        %1082 = vmatpush.msra.mxu0 %v1062
        %1083 = vmatmul.f32.gmra.mxu0 %v1065
        %v1084 = vpop.f32.mrf.mxu0
        %v1085 = vadd.f32 0.0, %v1084
        %1086 = vdwg.mxu0
        %v1088 = vsel %vm925, %v991, 0
        %1090 = vmatpush.msra.mxu0 0.0
        %1091 = vmatpush.msra.mxu0 0.0
        %1092 = vmatpush.msra.mxu0 0.0
        %1093 = vmatpush.msra.mxu0 0.0
        %1094 = vmatpush.msra.mxu0 0.0
        %1095 = vmatpush.msra.mxu0 0.0
        %1096 = vmatpush.msra.mxu0 0.0
        %1097 = vmatpush.msra.mxu0 0.0
        %1098 = vmatpush.msra.mxu0 0.0
        %1099 = vmatpush.msra.mxu0 0.0
        %1100 = vmatpush.msra.mxu0 0.0
        %1101 = vmatpush.msra.mxu0 0.0
        %1102 = vmatpush.msra.mxu0 0.0
        %1103 = vmatpush.msra.mxu0 0.0
        %1104 = vmatpush.msra.mxu0 %v994
        %1105 = vmatpush.msra.mxu0 %v993
        %1106 = vmatmul.f32.gmra.mxu0 %v1088
        %v1107 = vpop.f32.mrf.mxu0
        %v1108 = vadd.f32 %v1085, %v1107
        %1109 = vdwg.mxu0
        %v1110 = vld [vmem:[%s813] sm:$0x1]
        %v1112 = vperm.slane %v1110, 0
        %v1114 = vadd.f32 %v1108, %v1112
        %v1115 = vadd.f32 %v1114, %v888
        %v1116 = vld [vmem:[%s816] sm:$0x1]
        %v1117 = vld [vmem:[%s819] sm:$0x1]
        %v1118 = vsel %vm898, %v1115, 0.0
        %1119 = vadd.xlane.f32.xlu0 %v1118
        %v1120 = vpop.xlane.xlu0 %1119
        %v1121 = vrcp.pop 32.0
        %v1122 = vmul.f32 32.0, %v1121
        %v1123 = vsub.f32 1.0, %v1122
        %v1124 = vmul.f32 %v1121, %v1123
        %v1125 = vadd.f32 %v1121, %v1124
        %vm1126 = vweird.f32 %v1121
        %v1127 = vsel %vm1126, %v1121, %v1125
        %v1128 = vmul.f32 %v1120, %v1127
        %v1129 = vsub.f32 %v1115, %v1128
        %v1130 = vmul.f32 %v1129, %v1129
        %v1131 = vsel %vm898, %v1130, 0.0
        %1132 = vadd.xlane.f32.xlu0 %v1131
        %v1133 = vpop.xlane.xlu0 %1132
        %v1134 = vmul.f32 %v1133, %v1127
        %v1135 = vadd.f32 %v1134, 1e-12
        %v1136 = vrsqrt.pop %v1135
        %v1137 = vmul.f32 %v1136, %v1135
        %v1138 = vmul.f32 %v1137, %v1136
        %v1139 = vmul.f32 0.5, %v1138
        %v1140 = vsub.f32 1.5, %v1139
        %v1141 = vmul.f32 %v1136, %v1140
        %vm1142 = vweird.f32 %v1135
        %vm1143 = vweird.f32 %v1136
        %vm1144 = vmor %vm1142, %vm1143
        %v1145 = vsel %vm1144, %v1136, %v1141
        %v1146 = vmul.f32 %v1129, %v1145
        %v1148 = vperm.slane %v1116, 0
        %v1150 = vmul.f32 %v1146, %v1148
        %v1152 = vperm.slane %v1117, 0
        %v1154 = vadd.f32 %v1150, %v1152
        %v1155 = vld [vmem:[%s824] sm:$0xff]
        %v1156 = vld [vmem:[%s824 + $0x8] sm:$0xff]
        %v1157 = vld [vmem:[%s824 + $0x10] sm:$0xff]
        %v1158 = vld [vmem:[%s824 + $0x18] sm:$0xff]
        %v1159 = vld [vmem:[%s827] sm:$0x1]
        %v1161 = vperm.slane %v1159, 0
        %v1164 = vsel %vm898, %v1154, 0
        %1166 = vmatpush.msra.mxu0 0.0
        %1167 = vmatpush.msra.mxu0 0.0
        %1168 = vmatpush.msra.mxu0 0.0
        %1169 = vmatpush.msra.mxu0 0.0
        %1170 = vmatpush.msra.mxu0 0.0
        %1171 = vmatpush.msra.mxu0 0.0
        %1172 = vmatpush.msra.mxu0 0.0
        %1173 = vmatpush.msra.mxu0 0.0
        %1174 = vmatpush.msra.mxu0 0.0
        %1175 = vmatpush.msra.mxu0 0.0
        %1176 = vmatpush.msra.mxu0 0.0
        %1177 = vmatpush.msra.mxu0 0.0
        %1178 = vmatpush.msra.mxu0 %v1158
        %1179 = vmatpush.msra.mxu0 %v1157
        %1180 = vmatpush.msra.mxu0 %v1156
        %1181 = vmatpush.msra.mxu0 %v1155
        %1182 = vmatmul.f32.gmra.mxu0 %v1164
        %v1183 = vpop.f32.mrf.mxu0
        %v1184 = vadd.f32 %v1161, %v1183
        %1185 = vdwg.mxu0
        %v1186 = vmul.f32 %v1184, 0.5
        %v1187 = vmul.f32 %v1184, 0.044715
        %v1188 = vmul.f32 %v1187, %v1184
        %v1189 = vmul.f32 %v1188, %v1184
        %v1190 = vadd.f32 %v1184, %v1189
        %v1191 = vmul.f32 %v1190, 0.7978846
        %v1192 = vtanh.pop %v1191
        %v1193 = vadd.f32 %v1192, 1.0
        %v1194 = vmul.f32 %v1186, %v1193
        %v1195 = vld [vmem:[%s832] sm:$0xff]
        %v1196 = vld [vmem:[%s832 + $0x8] sm:$0xff]
        %v1197 = vld [vmem:[%s832 + $0x10] sm:$0xff]
        %v1198 = vld [vmem:[%s832 + $0x18] sm:$0xff]
        %v1199 = vld [vmem:[%s832 + $0x20] sm:$0xff]
        %v1200 = vld [vmem:[%s832 + $0x28] sm:$0xff]
        %v1201 = vld [vmem:[%s832 + $0x30] sm:$0xff]
        %v1202 = vld [vmem:[%s832 + $0x38] sm:$0xff]
        %v1203 = vld [vmem:[%s835] sm:$0x1]
        %v1205 = vperm.slane %v1203, 0
        %vm1207 = vcmask 523264
        %v1209 = vsel %vm1207, %v1194, 0
        %1211 = vmatpush.msra.mxu0 0.0
        %1212 = vmatpush.msra.mxu0 0.0
        %1213 = vmatpush.msra.mxu0 0.0
        %1214 = vmatpush.msra.mxu0 0.0
        %1215 = vmatpush.msra.mxu0 0.0
        %1216 = vmatpush.msra.mxu0 0.0
        %1217 = vmatpush.msra.mxu0 0.0
        %1218 = vmatpush.msra.mxu0 0.0
        %1219 = vmatpush.msra.mxu0 %v1202
        %1220 = vmatpush.msra.mxu0 %v1201
        %1221 = vmatpush.msra.mxu0 %v1200
        %1222 = vmatpush.msra.mxu0 %v1199
        %1223 = vmatpush.msra.mxu0 %v1198
        %1224 = vmatpush.msra.mxu0 %v1197
        %1225 = vmatpush.msra.mxu0 %v1196
        %1226 = vmatpush.msra.mxu0 %v1195
        %1227 = vmatmul.f32.gmra.mxu0 %v1209
        %v1228 = vpop.f32.mrf.mxu0
        %v1229 = vadd.f32 %v1205, %v1228
        %1230 = vdwg.mxu0
        %v1231 = vadd.f32 %v1229, %v1154
        %v1232 = vld [vmem:[%s838] sm:$0x1]
        %v1233 = vld [vmem:[%s841] sm:$0x1]
        %v1234 = vsel %vm898, %v1231, 0.0
        %1235 = vadd.xlane.f32.xlu0 %v1234
        %v1236 = vpop.xlane.xlu0 %1235
        %v1237 = vmul.f32 %v1236, %v1127
        %v1238 = vsub.f32 %v1231, %v1237
        %v1239 = vmul.f32 %v1238, %v1238
        %v1240 = vsel %vm898, %v1239, 0.0
        %1241 = vadd.xlane.f32.xlu0 %v1240
        %v1242 = vpop.xlane.xlu0 %1241
        %v1243 = vmul.f32 %v1242, %v1127
        %v1244 = vadd.f32 %v1243, 1e-12
        %v1245 = vrsqrt.pop %v1244
        %v1246 = vmul.f32 %v1245, %v1244
        %v1247 = vmul.f32 %v1246, %v1245
        %v1248 = vmul.f32 0.5, %v1247
        %v1249 = vsub.f32 1.5, %v1248
        %v1250 = vmul.f32 %v1245, %v1249
        %vm1251 = vweird.f32 %v1244
        %vm1252 = vweird.f32 %v1245
        %vm1253 = vmor %vm1251, %vm1252
        %v1254 = vsel %vm1253, %v1245, %v1250
        %v1255 = vmul.f32 %v1238, %v1254
        %v1257 = vperm.slane %v1232, 0
        %v1259 = vmul.f32 %v1255, %v1257
        %v1261 = vperm.slane %v1233, 0
        %v1263 = vadd.f32 %v1259, %v1261
        %1264 = vst.msk [vmem:[#allocation2] sm:$0xff] %vm898, %v1263
        %p1265 = scmp.eq.s32.totalorder %s39, 1
        // Predicated region
        $region105: #{pretrained_bert_forward.1} parent=99 // pred_check
          %p1266 = pneg %p1265
        $region106: #{pretrained_bert_forward.1} parent=99 // pred_check_branch
          %1268 = sbr.rel (%p1266) target = $region108
        $region107: #{pretrained_bert_forward.1} parent=99 // pred_region
          %v1269 = vld [vmem:[%s16] sm:$0xff]
          %v1270 = vld [vmem:[%s16 + $0x8] sm:$0xff]
          %v1271 = vld [vmem:[%s16 + $0x10] sm:$0xff]
          %v1272 = vld [vmem:[%s16 + $0x18] sm:$0xff]
          %v1273 = vld [vmem:[%s17] sm:$0x1]
          %v1275 = vsel %vm898, %v1263, 0
          %1277 = vmatpush.msra.mxu0 0.0
          %1278 = vmatpush.msra.mxu0 0.0
          %1279 = vmatpush.msra.mxu0 0.0
          %1280 = vmatpush.msra.mxu0 0.0
          %1281 = vmatpush.msra.mxu0 0.0
          %1282 = vmatpush.msra.mxu0 0.0
          %1283 = vmatpush.msra.mxu0 0.0
          %1284 = vmatpush.msra.mxu0 0.0
          %1285 = vmatpush.msra.mxu0 0.0
          %1286 = vmatpush.msra.mxu0 0.0
          %1287 = vmatpush.msra.mxu0 0.0
          %1288 = vmatpush.msra.mxu0 0.0
          %1289 = vmatpush.msra.mxu0 %v1272
          %1290 = vmatpush.msra.mxu0 %v1271
          %1291 = vmatpush.msra.mxu0 %v1270
          %1292 = vmatpush.msra.mxu0 %v1269
          %1293 = vmatmul.f32.gmra.mxu0 %v1275
          %v1294 = vpop.f32.mrf.mxu0
          %v1295 = vadd.f32 %v1273, %v1294
          %1296 = vdwg.mxu0
          %v1297 = vtanh.pop %v1295
          %v1298 = vld [vmem:[%s18] sm:$0xff]
          %v1299 = vld [vmem:[%s18 + $0x8] sm:$0xff]
          %v1300 = vld [vmem:[%s18 + $0x10] sm:$0xff]
          %v1301 = vld [vmem:[%s18 + $0x18] sm:$0xff]
          %v1302 = vld [vmem:[%s19] sm:$0x1]
          %v1304 = vsel %vm898, %v1297, 0
          %1306 = vmatpush.msra.mxu0 0.0
          %1307 = vmatpush.msra.mxu0 0.0
          %1308 = vmatpush.msra.mxu0 0.0
          %1309 = vmatpush.msra.mxu0 0.0
          %1310 = vmatpush.msra.mxu0 0.0
          %1311 = vmatpush.msra.mxu0 0.0
          %1312 = vmatpush.msra.mxu0 0.0
          %1313 = vmatpush.msra.mxu0 0.0
          %1314 = vmatpush.msra.mxu0 0.0
          %1315 = vmatpush.msra.mxu0 0.0
          %1316 = vmatpush.msra.mxu0 0.0
          %1317 = vmatpush.msra.mxu0 0.0
          %1318 = vmatpush.msra.mxu0 %v1301
          %1319 = vmatpush.msra.mxu0 %v1300
          %1320 = vmatpush.msra.mxu0 %v1299
          %1321 = vmatpush.msra.mxu0 %v1298
          %1322 = vmatmul.f32.gmra.mxu0 %v1304
          %v1323 = vpop.f32.mrf.mxu0
          %v1324 = vadd.f32 %v1302, %v1323
          %1325 = vdwg.mxu0
          %1326 = vst [vmem:[%s790] sm:$0x1] %v1324
        $region108: #{pretrained_bert_forward.1} parent=99 // pred_fallthru
          _
        %s1327 = sand.u32 %s544, 1
        %s1328 = scalar_lea.sflag [#allocation4], %s1327
        %s1329 = sand.u32 %s544, 1
        %s1330 = scalar_lea.vmem [#allocation3], %s1329
        // Predicated region
        $region109: #{pretrained_bert_forward.1} parent=99 // pred_check
          %p1331 = pneg %p554
        $region110: #{pretrained_bert_forward.1} parent=99 // pred_check_branch
          %1333 = sbr.rel (%p1331) target = $region112
        $region111: #{pretrained_bert_forward.1} parent=99 // pred_region
          %1335 = vsyncadd %s1328, 0
          %s1336 = scalar_lea.hbm %s20, %s38
          %s1338 = sshll.u32 %s1330, 4
          %s1339 = int_to_ptr.vmem [resolvable:$true] %s1338
          %s1340 = sshll.u32 %s1336, 4
          %s1341 = int_to_ptr.hbm [resolvable:$true] %s1340
          %1343 = dma.vmem_to_hbm [thread:$0]  %s1339, 16, %s1341, %s1328
        $region112: #{pretrained_bert_forward.1} parent=99 // pred_fallthru
          _
      $region100: #{pretrained_bert_forward.1} parent=5 // pred_fallthru
        _
      %p1344 = scmp.le.s32.totalorder 2, %s29
      // Predicated region
      $region113: #{pretrained_bert_forward.1} parent=5 // pred_check
        %p1345 = pneg %p1344
      $region114: #{pretrained_bert_forward.1} parent=5 // pred_check_branch
        %1347 = sbr.rel (%p1345) target = $region116
      $region115: #{pretrained_bert_forward.1} parent=5 // pred_region
        %s1348 = ssub.s32 %s29, 2
        // Predicated region
        $region117: #{pretrained_bert_forward.1} parent=115 // pred_check
          %p1349 = pneg %p560
        $region118: #{pretrained_bert_forward.1} parent=115 // pred_check_branch
          %1351 = sbr.rel (%p1349) target = $region120
        $region119: #{pretrained_bert_forward.1} parent=115 // pred_region
          %s1352 = sand.u32 %s545, 1
          %s1353 = scalar_lea.sflag [#allocation4], %s1352
          %s1354 = sand.u32 %s545, 1
          %s1355 = scalar_lea.vmem [#allocation3], %s1354
          %1357 = dma.done %s1353, 16
        $region120: #{pretrained_bert_forward.1} parent=115 // pred_fallthru
          _
      $region116: #{pretrained_bert_forward.1} parent=5 // pred_fallthru
        _
    $region6: #{pretrained_bert_forward.1} parent=1 // loop_footer
      %s33 = sadd.s32 1, %s29
    $region7: #{pretrained_bert_forward.1} parent=1 // loop_footer_branch
      %28 = sbr.rel target = $region3
    $region8: #{pretrained_bert_forward.1} parent=1 // loop_exit
      _
    %1358 = vsyncpa [#allocation4], 1
    %s1359 = scalar_lea.sflag [#allocation4], 1
    %1360 = vsyncpa %s1359, 1

</llo_original>
